<compile_context>
chip_gen: v5e
topology: v5e:2x2
jax: 0.10.0
libtpu: 0.0.40
codegen_flags: <defaults>
</compile_context>

<pallas_src>
import functools

import jax
import jax.numpy as jnp
from jax import lax
from jax.experimental import pallas as pl
from jax.experimental.pallas import tpu as pltpu


def _vmem_capacity_bytes():
    """Per-TensorCore VMEM; falls back to the smallest generation (v7x, 64 MiB)."""
    try:
        info = pltpu.get_tpu_info()
        for name in ("vmem_capacity_bytes", "vmem_bytes", "vmem_size_bytes"):
            cap = getattr(info, name, None)
            if cap:
                return int(cap)
    except Exception:
        pass
    return 64 * 1024 * 1024


def _head_kernel(cls_ref, patch_ref, wc_ref, wm_ref, b_ref, o_ref, sum_ref, *,
                 n_tokens, tn, mask_tail, compute_dtype, precision):
    k = pl.program_id(1)  # token-tile (reduction) axis, innermost

    @pl.when(k == 0)
    def _():
        sum_ref[...] = jnp.zeros_like(sum_ref)

    # Running f32 sum over the token axis (the 1/N scale is folded into wm_ref).
    x = patch_ref[...].astype(jnp.float32)                 # [tb, tn, D]
    if mask_tail:                                          # static: N % tn != 0
        tok = lax.broadcasted_iota(jnp.int32, x.shape, 1) + k * tn
        x = jnp.where(tok < n_tokens, x, 0.0)
    sum_ref[...] += jnp.sum(x, axis=1)

    @pl.when(k == pl.num_programs(1) - 1)
    def _():
        cls_x = cls_ref[...].astype(compute_dtype)         # [tb, D]
        pooled = sum_ref[...].astype(compute_dtype)        # [tb, D]
        # Split matmul instead of concat([cls, mean]) @ W (avoids the
        # cross-lane concat and the [tb, 2D] temp):
        #   logits = cls @ W[:D, :] + sum @ (W[D:, :] / N) + b
        logits = jnp.dot(cls_x, wc_ref[...],
                         preferred_element_type=jnp.float32,
                         precision=precision)
        logits = logits + jnp.dot(pooled, wm_ref[...],
                                  preferred_element_type=jnp.float32,
                                  precision=precision)
        o_ref[...] = (logits + b_ref[...].astype(jnp.float32)).astype(o_ref.dtype)


def prepare_head_params(weight, bias, num_patch_tokens, param_dtype=jnp.float32):
    """One-time prep (do this at model init, NOT per forward call).

    nn.Linear(2D, C) weight [C, 2D] / bias [C]  ->
      w_cls  [D, Cp]  transposed cls half, classes lane-padded to mult. of 128
      w_mean [D, Cp]  transposed mean half with 1/N folded in
      b_p    [1, Cp]
    """
    C, two_d = weight.shape
    D = two_d // 2
    c_pad = ((C + 127) // 128) * 128
    w_t = jnp.zeros((two_d, c_pad), jnp.float32).at[:, :C].set(
        weight.astype(jnp.float32).T)
    w_cls = w_t[:D].astype(param_dtype)
    w_mean = (w_t[D:] * (1.0 / float(num_patch_tokens))).astype(param_dtype)
    b_p = jnp.zeros((1, c_pad), jnp.float32).at[:, :C].set(
        bias.astype(jnp.float32)[None, :]).astype(param_dtype)
    return w_cls, w_mean, b_p


def _pick_tiles(B, N, D, c_pad, tok_bytes, par_bytes, budget, tb, tn):
    """VMEM-budget-aware tile selection."""

    def fixed_bytes(tb_):
        return (2 * tb_ * D * tok_bytes        # cls tokens, double-buffered
                + 2 * D * c_pad * par_bytes    # weight halves, single-buffered
                + 8 * c_pad * par_bytes        # bias (sublane padded)
                + 2 * tb_ * c_pad * 4          # f32 logits out, double-buffered
                + tb_ * D * 4)                 # f32 token-sum scratch

    def per_token_bytes(tb_):
        return 2 * tb_ * D * tok_bytes         # double-buffered patch stream

    if tb is None:
        if B % 8 != 0:
            tb = B                             # block dim == array dim is always legal
        else:
            cands = [c for c in (256, 128, 64, 32, 16, 8) if c <= B and B % c == 0]
            if not cands:
                tb = B
            else:
                # Prefer >= 2 batch tiles so v7x's second TensorCore gets work
                # (harmless on single-core v5e / v6e).
                multi = [c for c in cands if B // c >= 2]
                tb = multi[0] if multi else cands[0]
        # Shrink the batch tile if it leaves no room for a >= 16-token tile.
        while (tb >= 16 and tb % 16 == 0 and B % (tb // 2) == 0
               and budget - fixed_bytes(tb) < 16 * per_token_bytes(tb)):
            tb //= 2

    if tn is None:
        avail = budget - fixed_bytes(tb)
        tn_cap = max(16, avail // per_token_bytes(tb))
        if tn_cap >= N:
            tn = N                             # whole token axis in one step
        else:
            tn = max(16, (tn_cap // 16) * 16)  # multiple of 16 (bf16 sublane packing)
    return tb, tn


def linear_classifier_head(cls_token, patch_tokens, w_cls, w_mean, b_p,
                           num_classes, *, tb=None, tn=None):
    """cls_token [B,D], patch_tokens [B,N,D], prepared params -> logits [B,C].

    Tokens may be bf16 (half the HBM traffic on the mem-bound pooling stream);
    accumulation is always f32 inside the kernel.
    """
    B, D = cls_token.shape
    _, N, _ = patch_tokens.shape
    c_pad = w_cls.shape[1]
    tok_bytes = jnp.dtype(patch_tokens.dtype).itemsize
    par_bytes = jnp.dtype(w_cls.dtype).itemsize

    # Per-generation VMEM budget (~48 MiB on v7x, ~96 MiB on v5e/v6e).
    cap = _vmem_capacity_bytes()
    budget = cap * 3 // 4

    tb, tn = _pick_tiles(B, N, D, c_pad, tok_bytes, par_bytes, budget, tb, tn)
    num_k = -(-N // tn)
    mask_tail = (N % tn) != 0
    grid = (B // tb, num_k)

    # f32 params -> exact-f32 MXU passes; bf16 params -> single-pass bf16 MXU.
    if (jnp.dtype(w_cls.dtype) == jnp.float32
            and jnp.dtype(cls_token.dtype) == jnp.float32):
        compute_dtype, precision = jnp.float32, lax.Precision.HIGHEST
    else:
        compute_dtype, precision = jnp.dtype(w_cls.dtype), lax.Precision.DEFAULT

    kernel = functools.partial(
        _head_kernel, n_tokens=N, tn=tn, mask_tail=mask_tail,
        compute_dtype=compute_dtype, precision=precision)

    vmem_needed = (2 * tb * tn * D * tok_bytes + 2 * tb * D * tok_bytes
                   + 2 * D * c_pad * par_bytes + 8 * c_pad * par_bytes
                   + 2 * tb * c_pad * 4 + tb * D * 4)
    vmem_limit = int(min(cap * 9 // 10,
                         max(vmem_needed + (8 << 20), 32 << 20)))

    cost = pl.CostEstimate(
        flops=2 * B * (2 * D) * c_pad + B * N * D,
        transcendentals=0,
        bytes_accessed=(B * N * D * tok_bytes + B * D * tok_bytes
                        + 2 * D * c_pad * par_bytes + c_pad * par_bytes
                        + B * c_pad * 4))

    def build(single_buffer_consts):
        const_kwargs = (dict(pipeline_mode=pl.Buffered(1))
                        if single_buffer_consts else {})
        return pl.pallas_call(
            kernel,
            out_shape=jax.ShapeDtypeStruct((B, c_pad), jnp.float32),
            grid_spec=pltpu.PrefetchScalarGridSpec(
                num_scalar_prefetch=0,
                grid=grid,
                in_specs=[
                    pl.BlockSpec((tb, D), lambda i, k: (i, 0)),          # cls
                    pl.BlockSpec((tb, tn, D), lambda i, k: (i, k, 0)),   # patch tile
                    pl.BlockSpec((D, c_pad), lambda i, k: (0, 0),
                                 **const_kwargs),                        # W cls half
                    pl.BlockSpec((D, c_pad), lambda i, k: (0, 0),
                                 **const_kwargs),                        # W mean half
                    pl.BlockSpec((1, c_pad), lambda i, k: (0, 0),
                                 **const_kwargs),                        # bias
                ],
                out_specs=pl.BlockSpec((tb, c_pad), lambda i, k: (i, 0)),
                scratch_shapes=[pltpu.VMEM((tb, D), jnp.float32)],       # token sum
            ),
            compiler_params=pltpu.CompilerParams(
                dimension_semantics=("parallel", "arbitrary"),
                vmem_limit_bytes=vmem_limit),
            cost_estimate=cost,
        )

    try:
        out_padded = build(True)(cls_token, patch_tokens, w_cls, w_mean, b_p)
    except Exception:
        # TODO(synk): pipeline_mode=pl.Buffered(1) rejected on this jax build;
        # fall back to default double-buffered constant operands.
        out_padded = build(False)(cls_token, patch_tokens, w_cls, w_mean, b_p)

    return out_padded[:, :num_classes]


def reference_head(cls_tok, patches, w, b):
    feat = jnp.concatenate(
        [cls_tok.astype(jnp.float32),
         jnp.mean(patches.astype(jnp.float32), axis=1)], axis=1)
    return feat @ w.astype(jnp.float32).T + b.astype(jnp.float32)


if __name__ == "__main__":
    # Small shapes consistent with the module's forward:
    #   embed_dim D = 32, num patch tokens N = 16, batch B = 8, classes C = 16.
    B, N, D, C = 8, 16, 32, 16

    key = jax.random.PRNGKey(0)
    k_cls, k_patch, k_w, k_b = jax.random.split(key, 4)

    cls_token = jax.random.normal(k_cls, (B, D), dtype=jnp.float32)
    patch_tokens = jax.random.normal(k_patch, (B, N, D), dtype=jnp.float32)

    # nn.Linear(embed_dim * 2, num_classes): weight [C, 2D], bias [C].
    bound = 1.0 / (2.0 * D) ** 0.5
    weight = jax.random.uniform(k_w, (C, 2 * D), minval=-bound, maxval=bound,
                                dtype=jnp.float32)
    bias = jax.random.uniform(k_b, (C,), minval=-bound, maxval=bound,
                              dtype=jnp.float32)

    # --- f32 activations / f32 params (exact MXU path, tight check) ---
    w_cls32, w_mean32, b32 = prepare_head_params(weight, bias, N, jnp.float32)
    out = jax.block_until_ready(
        linear_classifier_head(cls_token, patch_tokens, w_cls32, w_mean32, b32, C))
    ref = reference_head(cls_token, patch_tokens, weight, bias)
    assert out.shape == (B, C)
    assert jnp.allclose(out, ref, atol=1e-4, rtol=1e-4)

    # --- bf16 activations / bf16 params (half HBM traffic, single-pass MXU) ---
    w_clsbf, w_meanbf, bbf = prepare_head_params(weight, bias, N, jnp.bfloat16)
    cls_bf = cls_token.astype(jnp.bfloat16)
    patch_bf = patch_tokens.astype(jnp.bfloat16)
    out_bf = jax.block_until_ready(
        linear_classifier_head(cls_bf, patch_bf, w_clsbf, w_meanbf, bbf, C))
    ref_bf = reference_head(cls_bf, patch_bf,
                            weight.astype(jnp.bfloat16), bias.astype(jnp.bfloat16))
    assert out_bf.shape == (B, C)
    assert jnp.allclose(out_bf, ref_bf, atol=1e-2, rtol=1e-2)

    # --- token count not divisible by the tile: masked tail path ---
    N2 = 40
    patch2 = jax.random.normal(jax.random.PRNGKey(1), (B, N2, D), dtype=jnp.float32)
    w_cls2, w_mean2, b2 = prepare_head_params(weight, bias, N2, jnp.float32)
    out2 = jax.block_until_ready(
        linear_classifier_head(cls_token, patch2, w_cls2, w_mean2, b2, C, tn=16))
    ref2 = reference_head(cls_token, patch2, weight, bias)
    assert out2.shape == (B, C)
    assert jnp.allclose(out2, ref2, atol=1e-4, rtol=1e-4)

    print("KERNEL_OK")
</pallas_src>

<mosaic_0001>
module attributes {stable_mosaic.version = 11 : i64} {
  func.func @_head_kernel(%arg0: i32, %arg1: i32, %arg2: memref<8x32xf32, #tpu.memory_space<vmem>>, %arg3: memref<8x16x32xf32, #tpu.memory_space<vmem>>, %arg4: memref<32x128xf32, #tpu.memory_space<vmem>>, %arg5: memref<32x128xf32, #tpu.memory_space<vmem>>, %arg6: memref<1x128xf32, #tpu.memory_space<vmem>>, %arg7: memref<8x128xf32, #tpu.memory_space<vmem>>, %arg8: memref<8x32xf32, #tpu.memory_space<vmem>>) attributes {dimension_semantics = [#tpu.dimension_semantics<parallel>, #tpu.dimension_semantics<arbitrary>], iteration_bounds = array<i64: 1, 1>, scalar_prefetch = 0 : i64, scratch_operands = 1 : i64, tpu.core_type = #tpu.core_type<tc>, window_params = [{transform_indices = @transform_0, window_bounds = array<i64: 8, 32>}, {transform_indices = @transform_1, window_bounds = array<i64: 8, 16, 32>}, {pipeline_mode = #tpu.pipeline_mode<synchronous>, transform_indices = @transform_2, window_bounds = array<i64: 32, 128>}, {pipeline_mode = #tpu.pipeline_mode<synchronous>, transform_indices = @transform_3, window_bounds = array<i64: 32, 128>}, {pipeline_mode = #tpu.pipeline_mode<synchronous>, transform_indices = @transform_4, window_bounds = array<i64: 1, 128>}, {transform_indices = @transform_5, window_bounds = array<i64: 8, 128>}]} {
    %c0_i32 = arith.constant 0 : i32
    %0 = arith.cmpi eq, %arg1, %c0_i32 : i32
    %1 = arith.extui %0 : i1 to i32
    %c0_i32_0 = arith.constant 0 : i32
    %2 = arith.cmpi ne, %1, %c0_i32_0 : i32
    scf.if %2 {
      %cst_9 = arith.constant 0.000000e+00 : f32
      %11 = vector.broadcast %cst_9 : f32 to vector<8x32xf32>
      %c0_10 = arith.constant 0 : index
      %c0_11 = arith.constant 0 : index
      %12 = vector.load %arg8[%c0_10, %c0_11] : memref<8x32xf32, #tpu.memory_space<vmem>>, vector<8x32xf32>
      tpu.vector_store %arg8[%c0_10, %c0_11], %11 {strides = array<i32>} : memref<8x32xf32, #tpu.memory_space<vmem>>, vector<8x32xf32>,
    } else {
    }
    %c0 = arith.constant 0 : index
    %c0_1 = arith.constant 0 : index
    %c0_2 = arith.constant 0 : index
    %3 = vector.load %arg3[%c0, %c0_1, %c0_2] : memref<8x16x32xf32, #tpu.memory_space<vmem>>, vector<8x16x32xf32>
    %c0_3 = arith.constant 0 : index
    %c0_4 = arith.constant 0 : index
    %4 = vector.load %arg8[%c0_3, %c0_4] : memref<8x32xf32, #tpu.memory_space<vmem>>, vector<8x32xf32>
    %cst = arith.constant dense<0.000000e+00> : vector<8x32xf32>
    %5 = vector.multi_reduction <add>, %3, %cst [1] : vector<8x16x32xf32> to vector<8x32xf32>
    %6 = arith.addf %4, %5 : vector<8x32xf32>
    %c0_5 = arith.constant 0 : index
    %c0_6 = arith.constant 0 : index
    %7 = vector.load %arg8[%c0_5, %c0_6] : memref<8x32xf32, #tpu.memory_space<vmem>>, vector<8x32xf32>
    tpu.vector_store %arg8[%c0_5, %c0_6], %6 {strides = array<i32>} : memref<8x32xf32, #tpu.memory_space<vmem>>, vector<8x32xf32>,
    %c0_i32_7 = arith.constant 0 : i32
    %8 = arith.cmpi eq, %arg1, %c0_i32_7 : i32
    %9 = arith.extui %8 : i1 to i32
    %c0_i32_8 = arith.constant 0 : i32
    %10 = arith.cmpi ne, %9, %c0_i32_8 : i32
    scf.if %10 {
      %c0_9 = arith.constant 0 : index
      %c0_10 = arith.constant 0 : index
      %11 = vector.load %arg2[%c0_9, %c0_10] : memref<8x32xf32, #tpu.memory_space<vmem>>, vector<8x32xf32>
      %c0_11 = arith.constant 0 : index
      %c0_12 = arith.constant 0 : index
      %12 = vector.load %arg8[%c0_11, %c0_12] : memref<8x32xf32, #tpu.memory_space<vmem>>, vector<8x32xf32>
      %c0_13 = arith.constant 0 : index
      %c0_14 = arith.constant 0 : index
      %13 = vector.load %arg4[%c0_13, %c0_14] : memref<32x128xf32, #tpu.memory_space<vmem>>, vector<32x128xf32>
      %cst_15 = arith.constant dense<0.000000e+00> : vector<8x128xf32>
      %14 = tpu.matmul %11, %13, %cst_15 {dimension_numbers = #tpu.dot_dimension_numbers<[1], [0], [0], [1], [0, 0, 1, 1], [], []>, precision = #tpu.contract_precision<fp32>} : vector<8x32xf32>, vector<32x128xf32>, vector<8x128xf32> -> vector<8x128xf32>
      %c0_16 = arith.constant 0 : index
      %c0_17 = arith.constant 0 : index
      %15 = vector.load %arg5[%c0_16, %c0_17] : memref<32x128xf32, #tpu.memory_space<vmem>>, vector<32x128xf32>
      %cst_18 = arith.constant dense<0.000000e+00> : vector<8x128xf32>
      %16 = tpu.matmul %12, %15, %cst_18 {dimension_numbers = #tpu.dot_dimension_numbers<[1], [0], [0], [1], [0, 0, 1, 1], [], []>, precision = #tpu.contract_precision<fp32>} : vector<8x32xf32>, vector<32x128xf32>, vector<8x128xf32> -> vector<8x128xf32>
      %17 = arith.addf %14, %16 : vector<8x128xf32>
      %c0_19 = arith.constant 0 : index
      %c0_20 = arith.constant 0 : index
      %18 = vector.load %arg6[%c0_19, %c0_20] : memref<1x128xf32, #tpu.memory_space<vmem>>, vector<1x128xf32>
      %19 = vector.broadcast %18 : vector<1x128xf32> to vector<8x128xf32>
      %20 = arith.addf %17, %19 : vector<8x128xf32>
      %c0_21 = arith.constant 0 : index
      %c0_22 = arith.constant 0 : index
      %21 = vector.load %arg7[%c0_21, %c0_22] : memref<8x128xf32, #tpu.memory_space<vmem>>, vector<8x128xf32>
      tpu.vector_store %arg7[%c0_21, %c0_22], %20 {strides = array<i32>} : memref<8x128xf32, #tpu.memory_space<vmem>>, vector<8x128xf32>,
    } else {
    }
    return
  }
  func.func @transform_0(%arg0: i32, %arg1: i32) -> (i32, i32) {
    %c0_i32 = arith.constant 0 : i32
    %c0_i32_0 = arith.constant 0 : i32
    return %arg0, %c0_i32 : i32, i32
  }
  func.func @transform_1(%arg0: i32, %arg1: i32) -> (i32, i32, i32) {
    %c0_i32 = arith.constant 0 : i32
    %c0_i32_0 = arith.constant 0 : i32
    return %arg0, %arg1, %c0_i32 : i32, i32, i32
  }
  func.func @transform_2(%arg0: i32, %arg1: i32) -> (i32, i32) {
    %c0_i32 = arith.constant 0 : i32
    %c0_i32_0 = arith.constant 0 : i32
    %c0_i32_1 = arith.constant 0 : i32
    return %c0_i32, %c0_i32_0 : i32, i32
  }
  func.func @transform_3(%arg0: i32, %arg1: i32) -> (i32, i32) {
    %c0_i32 = arith.constant 0 : i32
    %c0_i32_0 = arith.constant 0 : i32
    %c0_i32_1 = arith.constant 0 : i32
    return %c0_i32, %c0_i32_0 : i32, i32
  }
  func.func @transform_4(%arg0: i32, %arg1: i32) -> (i32, i32) {
    %c0_i32 = arith.constant 0 : i32
    %c0_i32_0 = arith.constant 0 : i32
    %c0_i32_1 = arith.constant 0 : i32
    return %c0_i32, %c0_i32_0 : i32, i32
  }
  func.func @transform_5(%arg0: i32, %arg1: i32) -> (i32, i32) {
    %c0_i32 = arith.constant 0 : i32
    %c0_i32_0 = arith.constant 0 : i32
    return %arg0, %c0_i32 : i32, i32
  }
}

module attributes {stable_mosaic.version = 11 : i64} {
  func.func @_head_kernel(%arg0: i32, %arg1: i32, %arg2: memref<8x32xf32, #tpu.memory_space<vmem>>, %arg3: memref<8x16x32xf32, #tpu.memory_space<vmem>>, %arg4: memref<32x128xf32, #tpu.memory_space<vmem>>, %arg5: memref<32x128xf32, #tpu.memory_space<vmem>>, %arg6: memref<1x128xf32, #tpu.memory_space<vmem>>, %arg7: memref<8x128xf32, #tpu.memory_space<vmem>>, %arg8: memref<8x32xf32, #tpu.memory_space<vmem>>) attributes {dimension_semantics = [#tpu.dimension_semantics<parallel>, #tpu.dimension_semantics<arbitrary>], iteration_bounds = array<i64: 1, 1>, scalar_prefetch = 0 : i64, scratch_operands = 1 : i64, tpu.core_type = #tpu.core_type<tc>, window_params = [{transform_indices = @transform_0, window_bounds = array<i64: 8, 32>}, {transform_indices = @transform_1, window_bounds = array<i64: 8, 16, 32>}, {pipeline_mode = #tpu.pipeline_mode<synchronous>, transform_indices = @transform_2, window_bounds = array<i64: 32, 128>}, {pipeline_mode = #tpu.pipeline_mode<synchronous>, transform_indices = @transform_3, window_bounds = array<i64: 32, 128>}, {pipeline_mode = #tpu.pipeline_mode<synchronous>, transform_indices = @transform_4, window_bounds = array<i64: 1, 128>}, {transform_indices = @transform_5, window_bounds = array<i64: 8, 128>}]} {
    %c0_i32 = arith.constant 0 : i32
    %0 = arith.cmpi eq, %arg1, %c0_i32 : i32
    %1 = arith.extui %0 : i1 to i32
    %c0_i32_0 = arith.constant 0 : i32
    %2 = arith.cmpi ne, %1, %c0_i32_0 : i32
    scf.if %2 {
      %cst_9 = arith.constant 0.000000e+00 : f32
      %11 = vector.broadcast %cst_9 : f32 to vector<8x32xf32>
      %c0_10 = arith.constant 0 : index
      %c0_11 = arith.constant 0 : index
      %12 = vector.load %arg8[%c0_10, %c0_11] : memref<8x32xf32, #tpu.memory_space<vmem>>, vector<8x32xf32>
      tpu.vector_store %arg8[%c0_10, %c0_11], %11 {strides = array<i32>} : memref<8x32xf32, #tpu.memory_space<vmem>>, vector<8x32xf32>,
    } else {
    }
    %c0 = arith.constant 0 : index
    %c0_1 = arith.constant 0 : index
    %c0_2 = arith.constant 0 : index
    %3 = vector.load %arg3[%c0, %c0_1, %c0_2] : memref<8x16x32xf32, #tpu.memory_space<vmem>>, vector<8x16x32xf32>
    %c0_3 = arith.constant 0 : index
    %c0_4 = arith.constant 0 : index
    %4 = vector.load %arg8[%c0_3, %c0_4] : memref<8x32xf32, #tpu.memory_space<vmem>>, vector<8x32xf32>
    %cst = arith.constant dense<0.000000e+00> : vector<8x32xf32>
    %5 = vector.multi_reduction <add>, %3, %cst [1] : vector<8x16x32xf32> to vector<8x32xf32>
    %6 = arith.addf %4, %5 : vector<8x32xf32>
    %c0_5 = arith.constant 0 : index
    %c0_6 = arith.constant 0 : index
    %7 = vector.load %arg8[%c0_5, %c0_6] : memref<8x32xf32, #tpu.memory_space<vmem>>, vector<8x32xf32>
    tpu.vector_store %arg8[%c0_5, %c0_6], %6 {strides = array<i32>} : memref<8x32xf32, #tpu.memory_space<vmem>>, vector<8x32xf32>,
    %c0_i32_7 = arith.constant 0 : i32
    %8 = arith.cmpi eq, %arg1, %c0_i32_7 : i32
    %9 = arith.extui %8 : i1 to i32
    %c0_i32_8 = arith.constant 0 : i32
    %10 = arith.cmpi ne, %9, %c0_i32_8 : i32
    scf.if %10 {
      %c0_9 = arith.constant 0 : index
      %c0_10 = arith.constant 0 : index
      %11 = vector.load %arg2[%c0_9, %c0_10] : memref<8x32xf32, #tpu.memory_space<vmem>>, vector<8x32xf32>
      %c0_11 = arith.constant 0 : index
      %c0_12 = arith.constant 0 : index
      %12 = vector.load %arg8[%c0_11, %c0_12] : memref<8x32xf32, #tpu.memory_space<vmem>>, vector<8x32xf32>
      %c0_13 = arith.constant 0 : index
      %c0_14 = arith.constant 0 : index
      %13 = vector.load %arg4[%c0_13, %c0_14] : memref<32x128xf32, #tpu.memory_space<vmem>>, vector<32x128xf32>
      %cst_15 = arith.constant dense<0.000000e+00> : vector<8x128xf32>
      %14 = tpu.matmul %11, %13, %cst_15 {dimension_numbers = #tpu.dot_dimension_numbers<[1], [0], [0], [1], [0, 0, 1, 1], [], []>, precision = #tpu.contract_precision<fp32>} : vector<8x32xf32>, vector<32x128xf32>, vector<8x128xf32> -> vector<8x128xf32>
      %c0_16 = arith.constant 0 : index
      %c0_17 = arith.constant 0 : index
      %15 = vector.load %arg5[%c0_16, %c0_17] : memref<32x128xf32, #tpu.memory_space<vmem>>, vector<32x128xf32>
      %cst_18 = arith.constant dense<0.000000e+00> : vector<8x128xf32>
      %16 = tpu.matmul %12, %15, %cst_18 {dimension_numbers = #tpu.dot_dimension_numbers<[1], [0], [0], [1], [0, 0, 1, 1], [], []>, precision = #tpu.contract_precision<fp32>} : vector<8x32xf32>, vector<32x128xf32>, vector<8x128xf32> -> vector<8x128xf32>
      %17 = arith.addf %14, %16 : vector<8x128xf32>
      %c0_19 = arith.constant 0 : index
      %c0_20 = arith.constant 0 : index
      %18 = vector.load %arg6[%c0_19, %c0_20] : memref<1x128xf32, #tpu.memory_space<vmem>>, vector<1x128xf32>
      %19 = vector.broadcast %18 : vector<1x128xf32> to vector<8x128xf32>
      %20 = arith.addf %17, %19 : vector<8x128xf32>
      %c0_21 = arith.constant 0 : index
      %c0_22 = arith.constant 0 : index
      %21 = vector.load %arg7[%c0_21, %c0_22] : memref<8x128xf32, #tpu.memory_space<vmem>>, vector<8x128xf32>
      tpu.vector_store %arg7[%c0_21, %c0_22], %20 {strides = array<i32>} : memref<8x128xf32, #tpu.memory_space<vmem>>, vector<8x128xf32>,
    } else {
    }
    return
  }
  func.func @transform_0(%arg0: i32, %arg1: i32) -> (i32, i32) {
    %c0_i32 = arith.constant 0 : i32
    %c0_i32_0 = arith.constant 0 : i32
    return %arg0, %c0_i32 : i32, i32
  }
  func.func @transform_1(%arg0: i32, %arg1: i32) -> (i32, i32, i32) {
    %c0_i32 = arith.constant 0 : i32
    %c0_i32_0 = arith.constant 0 : i32
    return %arg0, %arg1, %c0_i32 : i32, i32, i32
  }
  func.func @transform_2(%arg0: i32, %arg1: i32) -> (i32, i32) {
    %c0_i32 = arith.constant 0 : i32
    %c0_i32_0 = arith.constant 0 : i32
    %c0_i32_1 = arith.constant 0 : i32
    return %c0_i32, %c0_i32_0 : i32, i32
  }
  func.func @transform_3(%arg0: i32, %arg1: i32) -> (i32, i32) {
    %c0_i32 = arith.constant 0 : i32
    %c0_i32_0 = arith.constant 0 : i32
    %c0_i32_1 = arith.constant 0 : i32
    return %c0_i32, %c0_i32_0 : i32, i32
  }
  func.func @transform_4(%arg0: i32, %arg1: i32) -> (i32, i32) {
    %c0_i32 = arith.constant 0 : i32
    %c0_i32_0 = arith.constant 0 : i32
    %c0_i32_1 = arith.constant 0 : i32
    return %c0_i32, %c0_i32_0 : i32, i32
  }
  func.func @transform_5(%arg0: i32, %arg1: i32) -> (i32, i32) {
    %c0_i32 = arith.constant 0 : i32
    %c0_i32_0 = arith.constant 0 : i32
    return %arg0, %c0_i32 : i32, i32
  }
}

</mosaic_0001>

<llo_original>
// kernel: tpu_custom_call.1
$region0: #{tpu_custom_call.1}
  #allocation0 [shape = 'u32[]', space=smem, size = 0x4, offset = 0x4, fixed_abs, tag = 'smem constant byte address 0x4 - core index']
  #allocation1 [shape = 'u32[72,128]{1,0:T(1,128)}', space=vmem, size = 0x9000, scoped, tag = 'internal scratch']
  #allocation2 [shape = 'f32[8,32]{1,0:T(8,128)}', space=vmem, size = 0x1000, scoped, tag = 'scratch operand']
  %s0 = inlined_call_operand.hbm [shape: f32[8,32], index: 0, kind: input, shape index: {}]
  %s1 = inlined_call_operand.hbm [shape: f32[8,16,32], index: 1, kind: input, shape index: {}]
  %s2 = inlined_call_operand.hbm [shape: f32[32,128], index: 2, kind: input, shape index: {}]
  %s3 = inlined_call_operand.hbm [shape: f32[32,128], index: 3, kind: input, shape index: {}]
  %s4 = inlined_call_operand.vmem [shape: f32[1,128], index: 4, kind: input, shape index: {}]
  %s5 = inlined_call_operand.hbm [shape: f32[8,128], index: 5, kind: output, shape index: {}]
  %s6 = sld [smem:[#allocation0]]
  $region54: #{tpu_custom_call.1} parent=0
    _
  %s8 = ssub.s32 1, %s6
  %s9 = scalar_select 0, %s8, %s6
  $region1: #{tpu_custom_call.1} parent=0
    #allocation3 [shape = 'u8[4096]{0}', space=vmem, size = 0x1000, scoped, tag = 'input window, operand 0, single buffered']
    #allocation4 [shape = 's32[1]{0}', space=sflag, size = 0x4, scoped, tag = 'scoped memory for tpu_custom_call.1']
    #allocation5 [shape = 's32[1]{0}', space=sflag, size = 0x4, scoped, tag = 'scoped memory for tpu_custom_call.1']
    #allocation6 [shape = 'u8[65536]{0}', space=vmem, size = 0x10000, scoped, tag = 'input window, operand 1, single buffered']
    #allocation7 [shape = 's32[1]{0}', space=sflag, size = 0x4, scoped, tag = 'scoped memory for tpu_custom_call.1']
    #allocation8 [shape = 'u8[16384]{0}', space=vmem, size = 0x4000, scoped, tag = 'input window, operand 2, single buffered']
    #allocation9 [shape = 'u8[16384]{0}', space=vmem, size = 0x4000, scoped, tag = 'input window, operand 3, single buffered']
    #allocation10 [shape = 's32[1]{0}', space=sflag, size = 0x4, scoped, tag = 'scoped memory for tpu_custom_call.1']
    #allocation11 [shape = 'u8[4096]{0}', space=vmem, size = 0x1000, scoped, tag = 'output window, operand 0, single buffered']
    %10 = vsyncpa [#allocation4], 0
    %11 = vsyncpa [#allocation7], 0
    %12 = vsyncpa [#allocation10], 0
    %13 = vsyncpa [#allocation5], 0
    // Predicated region
    $region2: #{tpu_custom_call.1} parent=1 // pred_check
      _
    $region3: #{tpu_custom_call.1} parent=1 // pred_check_branch
      %15 = sbr.rel (0) target = $region5
    $region4: #{tpu_custom_call.1} parent=1 // pred_region
      %17 = vsyncadd [#allocation4], 0
      %s19 = sshll.u32 %s0, 4
      %s20 = int_to_ptr.hbm [resolvable:$true] %s19
      %s21 = sshll.u32 [#allocation3], 4
      %s22 = int_to_ptr.vmem [resolvable:$true] %s21
      %24 = dma.hbm_to_vmem [thread:$0]  %s20, 128, %s22, [#allocation4]
    $region5: #{tpu_custom_call.1} parent=1 // pred_fallthru
      _
    // Predicated region
    $region6: #{tpu_custom_call.1} parent=1 // pred_check
      _
    $region7: #{tpu_custom_call.1} parent=1 // pred_check_branch
      %26 = sbr.rel (0) target = $region9
    $region8: #{tpu_custom_call.1} parent=1 // pred_region
      %28 = vsyncadd [#allocation7], 0
      %s29 = sshll.u32 %s1, 4
      %s30 = int_to_ptr.hbm [resolvable:$true] %s29
      %s31 = sshll.u32 [#allocation6], 4
      %s32 = int_to_ptr.vmem [resolvable:$true] %s31
      %37 = dma.hbm_to_vmem [thread:$0]  %s30, 2048, %s32, [#allocation7], 128, 128, 8
    $region9: #{tpu_custom_call.1} parent=1 // pred_fallthru
      _
    // Predicated region
    $region10: #{tpu_custom_call.1} parent=1 // pred_check
      _
    $region11: #{tpu_custom_call.1} parent=1 // pred_check_branch
      %39 = sbr.rel (0) target = $region13
    $region12: #{tpu_custom_call.1} parent=1 // pred_region
      %41 = vsyncadd [#allocation7], 0
      %s42 = sshll.u32 %s2, 4
      %s43 = int_to_ptr.hbm [resolvable:$true] %s42
      %s44 = sshll.u32 [#allocation8], 4
      %s45 = int_to_ptr.vmem [resolvable:$true] %s44
      %50 = dma.hbm_to_vmem [thread:$0]  %s43, 512, %s45, [#allocation7], 128, 128, 8
    $region13: #{tpu_custom_call.1} parent=1 // pred_fallthru
      _
    // Predicated region
    $region14: #{tpu_custom_call.1} parent=1 // pred_check
      _
    $region15: #{tpu_custom_call.1} parent=1 // pred_check_branch
      %52 = sbr.rel (0) target = $region17
    $region16: #{tpu_custom_call.1} parent=1 // pred_region
      %54 = vsyncadd [#allocation10], 0
      %s55 = sshll.u32 %s3, 4
      %s56 = int_to_ptr.hbm [resolvable:$true] %s55
      %s57 = sshll.u32 [#allocation9], 4
      %s58 = int_to_ptr.vmem [resolvable:$true] %s57
      %63 = dma.hbm_to_vmem [thread:$0]  %s56, 512, %s58, [#allocation10], 128, 128, 8
    $region17: #{tpu_custom_call.1} parent=1 // pred_fallthru
      _
    // Predicated region
    $region18: #{tpu_custom_call.1} parent=1 // pred_check
      _
    $region19: #{tpu_custom_call.1} parent=1 // pred_check_branch
      %65 = sbr.rel (0) target = $region21
    $region20: #{tpu_custom_call.1} parent=1 // pred_region
      _
    $region21: #{tpu_custom_call.1} parent=1 // pred_fallthru
      _
    // Predicated region
    $region22: #{tpu_custom_call.1} parent=1 // pred_check
      _
    $region23: #{tpu_custom_call.1} parent=1 // pred_check_branch
      %67 = sbr.rel (0) target = $region25
    $region24: #{tpu_custom_call.1} parent=1 // pred_region
      %69 = dma.done [#allocation4], 128
    $region25: #{tpu_custom_call.1} parent=1 // pred_fallthru
      _
    // Predicated region
    $region26: #{tpu_custom_call.1} parent=1 // pred_check
      _
    $region27: #{tpu_custom_call.1} parent=1 // pred_check_branch
      %71 = sbr.rel (0) target = $region29
    $region28: #{tpu_custom_call.1} parent=1 // pred_region
      %73 = dma.done [#allocation7], 2048
    $region29: #{tpu_custom_call.1} parent=1 // pred_fallthru
      _
    // Predicated region
    $region30: #{tpu_custom_call.1} parent=1 // pred_check
      _
    $region31: #{tpu_custom_call.1} parent=1 // pred_check_branch
      %75 = sbr.rel (0) target = $region33
    $region32: #{tpu_custom_call.1} parent=1 // pred_region
      %77 = dma.done [#allocation7], 512
    $region33: #{tpu_custom_call.1} parent=1 // pred_fallthru
      _
    // Predicated region
    $region34: #{tpu_custom_call.1} parent=1 // pred_check
      _
    $region35: #{tpu_custom_call.1} parent=1 // pred_check_branch
      %79 = sbr.rel (0) target = $region37
    $region36: #{tpu_custom_call.1} parent=1 // pred_region
      %81 = dma.done [#allocation10], 512
    $region37: #{tpu_custom_call.1} parent=1 // pred_fallthru
      _
    %p82 = scmp.eq.s32.totalorder 0, 0
    // Predicated region
    $region38: #{tpu_custom_call.1} parent=1 // pred_check
      %p83 = pneg %p82
    $region39: #{tpu_custom_call.1} parent=1 // pred_check_branch
      %85 = sbr.rel (%p83) target = $region41
    $region40: #{tpu_custom_call.1} parent=1 // pred_region
      %vm86 = vcmask 261120
      %87 = vst.msk [vmem:[#allocation2] sm:$0xff] %vm86, 0.0
    $region41: #{tpu_custom_call.1} parent=1 // pred_fallthru
      _
    %v88 = vld [vmem:[#allocation6] sm:$0xff]
    %v89 = vld [vmem:[#allocation6 + $0x8] sm:$0xff]
    %v90 = vld [vmem:[#allocation6 + $0x10] sm:$0xff]
    %v91 = vld [vmem:[#allocation6 + $0x18] sm:$0xff]
    %v92 = vld [vmem:[#allocation6 + $0x20] sm:$0xff]
    %v93 = vld [vmem:[#allocation6 + $0x28] sm:$0xff]
    %v94 = vld [vmem:[#allocation6 + $0x30] sm:$0xff]
    %v95 = vld [vmem:[#allocation6 + $0x38] sm:$0xff]
    %v96 = vld [vmem:[#allocation6 + $0x40] sm:$0xff]
    %v97 = vld [vmem:[#allocation6 + $0x48] sm:$0xff]
    %v98 = vld [vmem:[#allocation6 + $0x50] sm:$0xff]
    %v99 = vld [vmem:[#allocation6 + $0x58] sm:$0xff]
    %v100 = vld [vmem:[#allocation6 + $0x60] sm:$0xff]
    %v101 = vld [vmem:[#allocation6 + $0x68] sm:$0xff]
    %v102 = vld [vmem:[#allocation6 + $0x70] sm:$0xff]
    %v103 = vld [vmem:[#allocation6 + $0x78] sm:$0xff]
    %v104 = vld [vmem:[#allocation2] sm:$0xff]
    %vm105 = vcmask 261120
    %v106 = vsel %vm105, %v88, 0.0
    %v107 = vsel %vm105, %v89, 0.0
    %v108 = vadd.f32 %v106, %v107
    %v109 = vrot.slane %v108, 4
    %v110 = vadd.f32 %v108, %v109
    %v111 = vrot.slane %v110, 2
    %v112 = vadd.f32 %v110, %v111
    %v113 = vrot.slane %v112, 1
    %v114 = vadd.f32 %v112, %v113
    %v115 = vsel %vm105, %v90, 0.0
    %v116 = vsel %vm105, %v91, 0.0
    %v117 = vadd.f32 %v115, %v116
    %v118 = vrot.slane %v117, 4
    %v119 = vadd.f32 %v117, %v118
    %v120 = vrot.slane %v119, 2
    %v121 = vadd.f32 %v119, %v120
    %v122 = vrot.slane %v121, 1
    %v123 = vadd.f32 %v121, %v122
    %v124 = vsel %vm105, %v92, 0.0
    %v125 = vsel %vm105, %v93, 0.0
    %v126 = vadd.f32 %v124, %v125
    %v127 = vrot.slane %v126, 4
    %v128 = vadd.f32 %v126, %v127
    %v129 = vrot.slane %v128, 2
    %v130 = vadd.f32 %v128, %v129
    %v131 = vrot.slane %v130, 1
    %v132 = vadd.f32 %v130, %v131
    %v133 = vsel %vm105, %v94, 0.0
    %v134 = vsel %vm105, %v95, 0.0
    %v135 = vadd.f32 %v133, %v134
    %v136 = vrot.slane %v135, 4
    %v137 = vadd.f32 %v135, %v136
    %v138 = vrot.slane %v137, 2
    %v139 = vadd.f32 %v137, %v138
    %v140 = vrot.slane %v139, 1
    %v141 = vadd.f32 %v139, %v140
    %v142 = vsel %vm105, %v96, 0.0
    %v143 = vsel %vm105, %v97, 0.0
    %v144 = vadd.f32 %v142, %v143
    %v145 = vrot.slane %v144, 4
    %v146 = vadd.f32 %v144, %v145
    %v147 = vrot.slane %v146, 2
    %v148 = vadd.f32 %v146, %v147
    %v149 = vrot.slane %v148, 1
    %v150 = vadd.f32 %v148, %v149
    %v151 = vsel %vm105, %v98, 0.0
    %v152 = vsel %vm105, %v99, 0.0
    %v153 = vadd.f32 %v151, %v152
    %v154 = vrot.slane %v153, 4
    %v155 = vadd.f32 %v153, %v154
    %v156 = vrot.slane %v155, 2
    %v157 = vadd.f32 %v155, %v156
    %v158 = vrot.slane %v157, 1
    %v159 = vadd.f32 %v157, %v158
    %v160 = vsel %vm105, %v100, 0.0
    %v161 = vsel %vm105, %v101, 0.0
    %v162 = vadd.f32 %v160, %v161
    %v163 = vrot.slane %v162, 4
    %v164 = vadd.f32 %v162, %v163
    %v165 = vrot.slane %v164, 2
    %v166 = vadd.f32 %v164, %v165
    %v167 = vrot.slane %v166, 1
    %v168 = vadd.f32 %v166, %v167
    %v169 = vsel %vm105, %v102, 0.0
    %v170 = vsel %vm105, %v103, 0.0
    %v171 = vadd.f32 %v169, %v170
    %v172 = vrot.slane %v171, 4
    %v173 = vadd.f32 %v171, %v172
    %v174 = vrot.slane %v173, 2
    %v175 = vadd.f32 %v173, %v174
    %v176 = vrot.slane %v175, 1
    %v177 = vadd.f32 %v175, %v176
    %vm186 = vcmask 1041409
    %v187 = vsel %vm186, %v123, %v114
    %vm188 = vcmask 1042434
    %v189 = vsel %vm188, %v132, %v187
    %vm190 = vcmask 1043459
    %v191 = vsel %vm190, %v141, %v189
    %vm192 = vcmask 1044484
    %v193 = vsel %vm192, %v150, %v191
    %vm194 = vcmask 1045509
    %v195 = vsel %vm194, %v159, %v193
    %vm196 = vcmask 1046534
    %v197 = vsel %vm196, %v168, %v195
    %vm198 = vcmask 1047559
    %v199 = vsel %vm198, %v177, %v197
    %v201 = vadd.f32 %v104, %v199
    %202 = vst.msk [vmem:[#allocation2] sm:$0xff] %vm105, %v201
    // Predicated region
    $region42: #{tpu_custom_call.1} parent=1 // pred_check
      %p203 = pneg %p82
    $region43: #{tpu_custom_call.1} parent=1 // pred_check_branch
      %205 = sbr.rel (%p203) target = $region45
    $region44: #{tpu_custom_call.1} parent=1 // pred_region
      %v206 = vld [vmem:[#allocation3] sm:$0xff]
      %v207 = vld [vmem:[#allocation2] sm:$0xff]
      %v208 = vld [vmem:[#allocation8] sm:$0xff]
      %v209 = vld [vmem:[#allocation8 + $0x8] sm:$0xff]
      %v210 = vld [vmem:[#allocation8 + $0x10] sm:$0xff]
      %v211 = vld [vmem:[#allocation8 + $0x18] sm:$0xff]
      %v212 = vld [vmem:[#allocation9] sm:$0xff]
      %v213 = vld [vmem:[#allocation9 + $0x8] sm:$0xff]
      %v214 = vld [vmem:[#allocation9 + $0x10] sm:$0xff]
      %v215 = vld [vmem:[#allocation9 + $0x18] sm:$0xff]
      %v217 = vsel %vm105, %v207, 0
      %219 = vmatpush.msra.mxu0 0.0
      %220 = vmatpush.msra.mxu0 0.0
      %221 = vmatpush.msra.mxu0 0.0
      %222 = vmatpush.msra.mxu0 0.0
      %223 = vmatpush.msra.mxu0 0.0
      %224 = vmatpush.msra.mxu0 0.0
      %225 = vmatpush.msra.mxu0 0.0
      %226 = vmatpush.msra.mxu0 0.0
      %227 = vmatpush.msra.mxu0 0.0
      %228 = vmatpush.msra.mxu0 0.0
      %229 = vmatpush.msra.mxu0 0.0
      %230 = vmatpush.msra.mxu0 0.0
      %v231 = vand.u32 %v215, 4294901760
      %232 = vmatpush.msra.mxu0 %v231
      %v233 = vand.u32 %v214, 4294901760
      %234 = vmatpush.msra.mxu0 %v233
      %v235 = vand.u32 %v213, 4294901760
      %236 = vmatpush.msra.mxu0 %v235
      %v237 = vand.u32 %v212, 4294901760
      %238 = vmatpush.msra.mxu0 %v237
      %v239 = vand.u32 %v217, 4294901760
      %v240 = vsub.f32 %v217, %v239
      %v241 = vand.u32 %v240, 4294901760
      %v242 = vsub.f32 %v240, %v241
      %v243 = vand.u32 %v242, 4294901760
      %244 = vmatmul.f32.gmra.mxu0 %v243
      %v245 = vpop.f32.mrf.mxu0
      %v246 = vadd.f32 0.0, %v245
      %247 = vdwg.mxu0
      %248 = vmatpush.msra.mxu0 0.0
      %249 = vmatpush.msra.mxu0 0.0
      %250 = vmatpush.msra.mxu0 0.0
      %251 = vmatpush.msra.mxu0 0.0
      %252 = vmatpush.msra.mxu0 0.0
      %253 = vmatpush.msra.mxu0 0.0
      %254 = vmatpush.msra.mxu0 0.0
      %255 = vmatpush.msra.mxu0 0.0
      %256 = vmatpush.msra.mxu0 0.0
      %257 = vmatpush.msra.mxu0 0.0
      %258 = vmatpush.msra.mxu0 0.0
      %259 = vmatpush.msra.mxu0 0.0
      %v260 = vand.u32 %v215, 4294901760
      %v261 = vsub.f32 %v215, %v260
      %v262 = vand.u32 %v261, 4294901760
      %v263 = vsub.f32 %v261, %v262
      %v264 = vand.u32 %v263, 4294901760
      %265 = vmatpush.msra.mxu0 %v264
      %v266 = vand.u32 %v214, 4294901760
      %v267 = vsub.f32 %v214, %v266
      %v268 = vand.u32 %v267, 4294901760
      %v269 = vsub.f32 %v267, %v268
      %v270 = vand.u32 %v269, 4294901760
      %271 = vmatpush.msra.mxu0 %v270
      %v272 = vand.u32 %v213, 4294901760
      %v273 = vsub.f32 %v213, %v272
      %v274 = vand.u32 %v273, 4294901760
      %v275 = vsub.f32 %v273, %v274
      %v276 = vand.u32 %v275, 4294901760
      %277 = vmatpush.msra.mxu0 %v276
      %v278 = vand.u32 %v212, 4294901760
      %v279 = vsub.f32 %v212, %v278
      %v280 = vand.u32 %v279, 4294901760
      %v281 = vsub.f32 %v279, %v280
      %v282 = vand.u32 %v281, 4294901760
      %283 = vmatpush.msra.mxu0 %v282
      %v284 = vand.u32 %v217, 4294901760
      %285 = vmatmul.f32.gmra.mxu0 %v284
      %v286 = vpop.f32.mrf.mxu0
      %v287 = vadd.f32 %v246, %v286
      %288 = vdwg.mxu0
      %289 = vmatpush.msra.mxu0 0.0
      %290 = vmatpush.msra.mxu0 0.0
      %291 = vmatpush.msra.mxu0 0.0
      %292 = vmatpush.msra.mxu0 0.0
      %293 = vmatpush.msra.mxu0 0.0
      %294 = vmatpush.msra.mxu0 0.0
      %295 = vmatpush.msra.mxu0 0.0
      %296 = vmatpush.msra.mxu0 0.0
      %297 = vmatpush.msra.mxu0 0.0
      %298 = vmatpush.msra.mxu0 0.0
      %299 = vmatpush.msra.mxu0 0.0
      %300 = vmatpush.msra.mxu0 0.0
      %v301 = vand.u32 %v215, 4294901760
      %v302 = vsub.f32 %v215, %v301
      %303 = vmatpush.msra.mxu0 %v302
      %v304 = vand.u32 %v214, 4294901760
      %v305 = vsub.f32 %v214, %v304
      %306 = vmatpush.msra.mxu0 %v305
      %v307 = vand.u32 %v213, 4294901760
      %v308 = vsub.f32 %v213, %v307
      %309 = vmatpush.msra.mxu0 %v308
      %v310 = vand.u32 %v212, 4294901760
      %v311 = vsub.f32 %v212, %v310
      %312 = vmatpush.msra.mxu0 %v311
      %v313 = vand.u32 %v217, 4294901760
      %v314 = vsub.f32 %v217, %v313
      %315 = vmatmul.f32.gmra.mxu0 %v314
      %v316 = vpop.f32.mrf.mxu0
      %v317 = vadd.f32 %v287, %v316
      %318 = vdwg.mxu0
      %319 = vmatpush.msra.mxu0 0.0
      %320 = vmatpush.msra.mxu0 0.0
      %321 = vmatpush.msra.mxu0 0.0
      %322 = vmatpush.msra.mxu0 0.0
      %323 = vmatpush.msra.mxu0 0.0
      %324 = vmatpush.msra.mxu0 0.0
      %325 = vmatpush.msra.mxu0 0.0
      %326 = vmatpush.msra.mxu0 0.0
      %327 = vmatpush.msra.mxu0 0.0
      %328 = vmatpush.msra.mxu0 0.0
      %329 = vmatpush.msra.mxu0 0.0
      %330 = vmatpush.msra.mxu0 0.0
      %v331 = vand.u32 %v215, 4294901760
      %332 = vmatpush.msra.mxu0 %v331
      %v333 = vand.u32 %v214, 4294901760
      %334 = vmatpush.msra.mxu0 %v333
      %v335 = vand.u32 %v213, 4294901760
      %336 = vmatpush.msra.mxu0 %v335
      %v337 = vand.u32 %v212, 4294901760
      %338 = vmatpush.msra.mxu0 %v337
      %v339 = vand.u32 %v217, 4294901760
      %v340 = vsub.f32 %v217, %v339
      %v341 = vand.u32 %v340, 4294901760
      %342 = vmatmul.f32.gmra.mxu0 %v341
      %v343 = vpop.f32.mrf.mxu0
      %v344 = vadd.f32 %v317, %v343
      %345 = vdwg.mxu0
      %346 = vmatpush.msra.mxu0 0.0
      %347 = vmatpush.msra.mxu0 0.0
      %348 = vmatpush.msra.mxu0 0.0
      %349 = vmatpush.msra.mxu0 0.0
      %350 = vmatpush.msra.mxu0 0.0
      %351 = vmatpush.msra.mxu0 0.0
      %352 = vmatpush.msra.mxu0 0.0
      %353 = vmatpush.msra.mxu0 0.0
      %354 = vmatpush.msra.mxu0 0.0
      %355 = vmatpush.msra.mxu0 0.0
      %356 = vmatpush.msra.mxu0 0.0
      %357 = vmatpush.msra.mxu0 0.0
      %v358 = vand.u32 %v215, 4294901760
      %v359 = vsub.f32 %v215, %v358
      %v360 = vand.u32 %v359, 4294901760
      %361 = vmatpush.msra.mxu0 %v360
      %v362 = vand.u32 %v214, 4294901760
      %v363 = vsub.f32 %v214, %v362
      %v364 = vand.u32 %v363, 4294901760
      %365 = vmatpush.msra.mxu0 %v364
      %v366 = vand.u32 %v213, 4294901760
      %v367 = vsub.f32 %v213, %v366
      %v368 = vand.u32 %v367, 4294901760
      %369 = vmatpush.msra.mxu0 %v368
      %v370 = vand.u32 %v212, 4294901760
      %v371 = vsub.f32 %v212, %v370
      %v372 = vand.u32 %v371, 4294901760
      %373 = vmatpush.msra.mxu0 %v372
      %v374 = vand.u32 %v217, 4294901760
      %375 = vmatmul.f32.gmra.mxu0 %v374
      %v376 = vpop.f32.mrf.mxu0
      %v377 = vadd.f32 %v344, %v376
      %378 = vdwg.mxu0
      %379 = vmatpush.msra.mxu0 0.0
      %380 = vmatpush.msra.mxu0 0.0
      %381 = vmatpush.msra.mxu0 0.0
      %382 = vmatpush.msra.mxu0 0.0
      %383 = vmatpush.msra.mxu0 0.0
      %384 = vmatpush.msra.mxu0 0.0
      %385 = vmatpush.msra.mxu0 0.0
      %386 = vmatpush.msra.mxu0 0.0
      %387 = vmatpush.msra.mxu0 0.0
      %388 = vmatpush.msra.mxu0 0.0
      %389 = vmatpush.msra.mxu0 0.0
      %390 = vmatpush.msra.mxu0 0.0
      %v391 = vand.u32 %v215, 4294901760
      %392 = vmatpush.msra.mxu0 %v391
      %v393 = vand.u32 %v214, 4294901760
      %394 = vmatpush.msra.mxu0 %v393
      %v395 = vand.u32 %v213, 4294901760
      %396 = vmatpush.msra.mxu0 %v395
      %v397 = vand.u32 %v212, 4294901760
      %398 = vmatpush.msra.mxu0 %v397
      %v399 = vand.u32 %v217, 4294901760
      %400 = vmatmul.f32.gmra.mxu0 %v399
      %v401 = vpop.f32.mrf.mxu0
      %v402 = vadd.f32 %v377, %v401
      %403 = vdwg.mxu0
      %v405 = vsel %vm105, %v206, 0
      %407 = vmatpush.msra.mxu0 0.0
      %408 = vmatpush.msra.mxu0 0.0
      %409 = vmatpush.msra.mxu0 0.0
      %410 = vmatpush.msra.mxu0 0.0
      %411 = vmatpush.msra.mxu0 0.0
      %412 = vmatpush.msra.mxu0 0.0
      %413 = vmatpush.msra.mxu0 0.0
      %414 = vmatpush.msra.mxu0 0.0
      %415 = vmatpush.msra.mxu0 0.0
      %416 = vmatpush.msra.mxu0 0.0
      %417 = vmatpush.msra.mxu0 0.0
      %418 = vmatpush.msra.mxu0 0.0
      %v419 = vand.u32 %v211, 4294901760
      %420 = vmatpush.msra.mxu0 %v419
      %v421 = vand.u32 %v210, 4294901760
      %422 = vmatpush.msra.mxu0 %v421
      %v423 = vand.u32 %v209, 4294901760
      %424 = vmatpush.msra.mxu0 %v423
      %v425 = vand.u32 %v208, 4294901760
      %426 = vmatpush.msra.mxu0 %v425
      %v427 = vand.u32 %v405, 4294901760
      %v428 = vsub.f32 %v405, %v427
      %v429 = vand.u32 %v428, 4294901760
      %v430 = vsub.f32 %v428, %v429
      %v431 = vand.u32 %v430, 4294901760
      %432 = vmatmul.f32.gmra.mxu0 %v431
      %v433 = vpop.f32.mrf.mxu0
      %v434 = vadd.f32 %v402, %v433
      %435 = vdwg.mxu0
      %436 = vmatpush.msra.mxu0 0.0
      %437 = vmatpush.msra.mxu0 0.0
      %438 = vmatpush.msra.mxu0 0.0
      %439 = vmatpush.msra.mxu0 0.0
      %440 = vmatpush.msra.mxu0 0.0
      %441 = vmatpush.msra.mxu0 0.0
      %442 = vmatpush.msra.mxu0 0.0
      %443 = vmatpush.msra.mxu0 0.0
      %444 = vmatpush.msra.mxu0 0.0
      %445 = vmatpush.msra.mxu0 0.0
      %446 = vmatpush.msra.mxu0 0.0
      %447 = vmatpush.msra.mxu0 0.0
      %v448 = vand.u32 %v211, 4294901760
      %v449 = vsub.f32 %v211, %v448
      %v450 = vand.u32 %v449, 4294901760
      %v451 = vsub.f32 %v449, %v450
      %v452 = vand.u32 %v451, 4294901760
      %453 = vmatpush.msra.mxu0 %v452
      %v454 = vand.u32 %v210, 4294901760
      %v455 = vsub.f32 %v210, %v454
      %v456 = vand.u32 %v455, 4294901760
      %v457 = vsub.f32 %v455, %v456
      %v458 = vand.u32 %v457, 4294901760
      %459 = vmatpush.msra.mxu0 %v458
      %v460 = vand.u32 %v209, 4294901760
      %v461 = vsub.f32 %v209, %v460
      %v462 = vand.u32 %v461, 4294901760
      %v463 = vsub.f32 %v461, %v462
      %v464 = vand.u32 %v463, 4294901760
      %465 = vmatpush.msra.mxu0 %v464
      %v466 = vand.u32 %v208, 4294901760
      %v467 = vsub.f32 %v208, %v466
      %v468 = vand.u32 %v467, 4294901760
      %v469 = vsub.f32 %v467, %v468
      %v470 = vand.u32 %v469, 4294901760
      %471 = vmatpush.msra.mxu0 %v470
      %v472 = vand.u32 %v405, 4294901760
      %473 = vmatmul.f32.gmra.mxu0 %v472
      %v474 = vpop.f32.mrf.mxu0
      %v475 = vadd.f32 %v434, %v474
      %476 = vdwg.mxu0
      %477 = vmatpush.msra.mxu0 0.0
      %478 = vmatpush.msra.mxu0 0.0
      %479 = vmatpush.msra.mxu0 0.0
      %480 = vmatpush.msra.mxu0 0.0
      %481 = vmatpush.msra.mxu0 0.0
      %482 = vmatpush.msra.mxu0 0.0
      %483 = vmatpush.msra.mxu0 0.0
      %484 = vmatpush.msra.mxu0 0.0
      %485 = vmatpush.msra.mxu0 0.0
      %486 = vmatpush.msra.mxu0 0.0
      %487 = vmatpush.msra.mxu0 0.0
      %488 = vmatpush.msra.mxu0 0.0
      %v489 = vand.u32 %v211, 4294901760
      %v490 = vsub.f32 %v211, %v489
      %491 = vmatpush.msra.mxu0 %v490
      %v492 = vand.u32 %v210, 4294901760
      %v493 = vsub.f32 %v210, %v492
      %494 = vmatpush.msra.mxu0 %v493
      %v495 = vand.u32 %v209, 4294901760
      %v496 = vsub.f32 %v209, %v495
      %497 = vmatpush.msra.mxu0 %v496
      %v498 = vand.u32 %v208, 4294901760
      %v499 = vsub.f32 %v208, %v498
      %500 = vmatpush.msra.mxu0 %v499
      %v501 = vand.u32 %v405, 4294901760
      %v502 = vsub.f32 %v405, %v501
      %503 = vmatmul.f32.gmra.mxu0 %v502
      %v504 = vpop.f32.mrf.mxu0
      %v505 = vadd.f32 %v475, %v504
      %506 = vdwg.mxu0
      %507 = vmatpush.msra.mxu0 0.0
      %508 = vmatpush.msra.mxu0 0.0
      %509 = vmatpush.msra.mxu0 0.0
      %510 = vmatpush.msra.mxu0 0.0
      %511 = vmatpush.msra.mxu0 0.0
      %512 = vmatpush.msra.mxu0 0.0
      %513 = vmatpush.msra.mxu0 0.0
      %514 = vmatpush.msra.mxu0 0.0
      %515 = vmatpush.msra.mxu0 0.0
      %516 = vmatpush.msra.mxu0 0.0
      %517 = vmatpush.msra.mxu0 0.0
      %518 = vmatpush.msra.mxu0 0.0
      %v519 = vand.u32 %v211, 4294901760
      %520 = vmatpush.msra.mxu0 %v519
      %v521 = vand.u32 %v210, 4294901760
      %522 = vmatpush.msra.mxu0 %v521
      %v523 = vand.u32 %v209, 4294901760
      %524 = vmatpush.msra.mxu0 %v523
      %v525 = vand.u32 %v208, 4294901760
      %526 = vmatpush.msra.mxu0 %v525
      %v527 = vand.u32 %v405, 4294901760
      %v528 = vsub.f32 %v405, %v527
      %v529 = vand.u32 %v528, 4294901760
      %530 = vmatmul.f32.gmra.mxu0 %v529
      %v531 = vpop.f32.mrf.mxu0
      %v532 = vadd.f32 %v505, %v531
      %533 = vdwg.mxu0
      %534 = vmatpush.msra.mxu0 0.0
      %535 = vmatpush.msra.mxu0 0.0
      %536 = vmatpush.msra.mxu0 0.0
      %537 = vmatpush.msra.mxu0 0.0
      %538 = vmatpush.msra.mxu0 0.0
      %539 = vmatpush.msra.mxu0 0.0
      %540 = vmatpush.msra.mxu0 0.0
      %541 = vmatpush.msra.mxu0 0.0
      %542 = vmatpush.msra.mxu0 0.0
      %543 = vmatpush.msra.mxu0 0.0
      %544 = vmatpush.msra.mxu0 0.0
      %545 = vmatpush.msra.mxu0 0.0
      %v546 = vand.u32 %v211, 4294901760
      %v547 = vsub.f32 %v211, %v546
      %v548 = vand.u32 %v547, 4294901760
      %549 = vmatpush.msra.mxu0 %v548
      %v550 = vand.u32 %v210, 4294901760
      %v551 = vsub.f32 %v210, %v550
      %v552 = vand.u32 %v551, 4294901760
      %553 = vmatpush.msra.mxu0 %v552
      %v554 = vand.u32 %v209, 4294901760
      %v555 = vsub.f32 %v209, %v554
      %v556 = vand.u32 %v555, 4294901760
      %557 = vmatpush.msra.mxu0 %v556
      %v558 = vand.u32 %v208, 4294901760
      %v559 = vsub.f32 %v208, %v558
      %v560 = vand.u32 %v559, 4294901760
      %561 = vmatpush.msra.mxu0 %v560
      %v562 = vand.u32 %v405, 4294901760
      %563 = vmatmul.f32.gmra.mxu0 %v562
      %v564 = vpop.f32.mrf.mxu0
      %v565 = vadd.f32 %v532, %v564
      %566 = vdwg.mxu0
      %567 = vmatpush.msra.mxu0 0.0
      %568 = vmatpush.msra.mxu0 0.0
      %569 = vmatpush.msra.mxu0 0.0
      %570 = vmatpush.msra.mxu0 0.0
      %571 = vmatpush.msra.mxu0 0.0
      %572 = vmatpush.msra.mxu0 0.0
      %573 = vmatpush.msra.mxu0 0.0
      %574 = vmatpush.msra.mxu0 0.0
      %575 = vmatpush.msra.mxu0 0.0
      %576 = vmatpush.msra.mxu0 0.0
      %577 = vmatpush.msra.mxu0 0.0
      %578 = vmatpush.msra.mxu0 0.0
      %v579 = vand.u32 %v211, 4294901760
      %580 = vmatpush.msra.mxu0 %v579
      %v581 = vand.u32 %v210, 4294901760
      %582 = vmatpush.msra.mxu0 %v581
      %v583 = vand.u32 %v209, 4294901760
      %584 = vmatpush.msra.mxu0 %v583
      %v585 = vand.u32 %v208, 4294901760
      %586 = vmatpush.msra.mxu0 %v585
      %v587 = vand.u32 %v405, 4294901760
      %588 = vmatmul.f32.gmra.mxu0 %v587
      %v589 = vpop.f32.mrf.mxu0
      %v590 = vadd.f32 %v565, %v589
      %591 = vdwg.mxu0
      %v592 = vld [vmem:[%s4] sm:$0x1]
      %v594 = vperm.slane %v592, 0
      %v596 = vadd.f32 %v590, %v594
      %597 = vst [vmem:[#allocation11] sm:$0xff] %v596
    $region45: #{tpu_custom_call.1} parent=1 // pred_fallthru
      _
    // Predicated region
    $region46: #{tpu_custom_call.1} parent=1 // pred_check
      _
    $region47: #{tpu_custom_call.1} parent=1 // pred_check_branch
      %599 = sbr.rel (0) target = $region49
    $region48: #{tpu_custom_call.1} parent=1 // pred_region
      %601 = vsyncadd [#allocation5], 0
      %s603 = sshll.u32 [#allocation11], 4
      %s604 = int_to_ptr.vmem [resolvable:$true] %s603
      %s605 = sshll.u32 %s5, 4
      %s606 = int_to_ptr.hbm [resolvable:$true] %s605
      %608 = dma.vmem_to_hbm [thread:$0]  %s604, 128, %s606, [#allocation5]
    $region49: #{tpu_custom_call.1} parent=1 // pred_fallthru
      _
    // Predicated region
    $region50: #{tpu_custom_call.1} parent=1 // pred_check
      _
    $region51: #{tpu_custom_call.1} parent=1 // pred_check_branch
      %610 = sbr.rel (0) target = $region53
    $region52: #{tpu_custom_call.1} parent=1 // pred_region
      %612 = dma.done [#allocation5], 128
    $region53: #{tpu_custom_call.1} parent=1 // pred_fallthru
      _
    %613 = vsyncpa [#allocation4], 1
    %614 = vsyncpa [#allocation7], 1
    %615 = vsyncpa [#allocation10], 1
    %616 = vsyncpa [#allocation5], 1

// kernel: tpu_custom_call.1
$region0: #{tpu_custom_call.1}
  #allocation0 [shape = 'u32[]', space=smem, size = 0x4, offset = 0x4, fixed_abs, tag = 'smem constant byte address 0x4 - core index']
  #allocation1 [shape = 'u32[72,128]{1,0:T(1,128)}', space=vmem, size = 0x9000, scoped, tag = 'internal scratch']
  #allocation2 [shape = 'f32[8,32]{1,0:T(8,128)}', space=vmem, size = 0x1000, scoped, tag = 'scratch operand']
  %s0 = inlined_call_operand.hbm [shape: f32[8,32], index: 0, kind: input, shape index: {}]
  %s1 = inlined_call_operand.hbm [shape: f32[8,16,32], index: 1, kind: input, shape index: {}]
  %s2 = inlined_call_operand.hbm [shape: f32[32,128], index: 2, kind: input, shape index: {}]
  %s3 = inlined_call_operand.hbm [shape: f32[32,128], index: 3, kind: input, shape index: {}]
  %s4 = inlined_call_operand.vmem [shape: f32[1,128], index: 4, kind: input, shape index: {}]
  %s5 = inlined_call_operand.hbm [shape: f32[8,128], index: 5, kind: output, shape index: {}]
  %s6 = sld [smem:[#allocation0]]
  $region54: #{tpu_custom_call.1} parent=0
    _
  %s8 = ssub.s32 1, %s6
  %s9 = scalar_select 0, %s8, %s6
  $region1: #{tpu_custom_call.1} parent=0
    #allocation3 [shape = 'u8[4096]{0}', space=vmem, size = 0x1000, scoped, tag = 'input window, operand 0, single buffered']
    #allocation4 [shape = 's32[1]{0}', space=sflag, size = 0x4, scoped, tag = 'scoped memory for tpu_custom_call.1']
    #allocation5 [shape = 's32[1]{0}', space=sflag, size = 0x4, scoped, tag = 'scoped memory for tpu_custom_call.1']
    #allocation6 [shape = 'u8[65536]{0}', space=vmem, size = 0x10000, scoped, tag = 'input window, operand 1, single buffered']
    #allocation7 [shape = 's32[1]{0}', space=sflag, size = 0x4, scoped, tag = 'scoped memory for tpu_custom_call.1']
    #allocation8 [shape = 'u8[16384]{0}', space=vmem, size = 0x4000, scoped, tag = 'input window, operand 2, single buffered']
    #allocation9 [shape = 'u8[16384]{0}', space=vmem, size = 0x4000, scoped, tag = 'input window, operand 3, single buffered']
    #allocation10 [shape = 's32[1]{0}', space=sflag, size = 0x4, scoped, tag = 'scoped memory for tpu_custom_call.1']
    #allocation11 [shape = 'u8[4096]{0}', space=vmem, size = 0x1000, scoped, tag = 'output window, operand 0, single buffered']
    %10 = vsyncpa [#allocation4], 0
    %11 = vsyncpa [#allocation7], 0
    %12 = vsyncpa [#allocation10], 0
    %13 = vsyncpa [#allocation5], 0
    // Predicated region
    $region2: #{tpu_custom_call.1} parent=1 // pred_check
      _
    $region3: #{tpu_custom_call.1} parent=1 // pred_check_branch
      %15 = sbr.rel (0) target = $region5
    $region4: #{tpu_custom_call.1} parent=1 // pred_region
      %17 = vsyncadd [#allocation4], 0
      %s19 = sshll.u32 %s0, 4
      %s20 = int_to_ptr.hbm [resolvable:$true] %s19
      %s21 = sshll.u32 [#allocation3], 4
      %s22 = int_to_ptr.vmem [resolvable:$true] %s21
      %24 = dma.hbm_to_vmem [thread:$0]  %s20, 128, %s22, [#allocation4]
    $region5: #{tpu_custom_call.1} parent=1 // pred_fallthru
      _
    // Predicated region
    $region6: #{tpu_custom_call.1} parent=1 // pred_check
      _
    $region7: #{tpu_custom_call.1} parent=1 // pred_check_branch
      %26 = sbr.rel (0) target = $region9
    $region8: #{tpu_custom_call.1} parent=1 // pred_region
      %28 = vsyncadd [#allocation7], 0
      %s29 = sshll.u32 %s1, 4
      %s30 = int_to_ptr.hbm [resolvable:$true] %s29
      %s31 = sshll.u32 [#allocation6], 4
      %s32 = int_to_ptr.vmem [resolvable:$true] %s31
      %37 = dma.hbm_to_vmem [thread:$0]  %s30, 2048, %s32, [#allocation7], 128, 128, 8
    $region9: #{tpu_custom_call.1} parent=1 // pred_fallthru
      _
    // Predicated region
    $region10: #{tpu_custom_call.1} parent=1 // pred_check
      _
    $region11: #{tpu_custom_call.1} parent=1 // pred_check_branch
      %39 = sbr.rel (0) target = $region13
    $region12: #{tpu_custom_call.1} parent=1 // pred_region
      %41 = vsyncadd [#allocation7], 0
      %s42 = sshll.u32 %s2, 4
      %s43 = int_to_ptr.hbm [resolvable:$true] %s42
      %s44 = sshll.u32 [#allocation8], 4
      %s45 = int_to_ptr.vmem [resolvable:$true] %s44
      %50 = dma.hbm_to_vmem [thread:$0]  %s43, 512, %s45, [#allocation7], 128, 128, 8
    $region13: #{tpu_custom_call.1} parent=1 // pred_fallthru
      _
    // Predicated region
    $region14: #{tpu_custom_call.1} parent=1 // pred_check
      _
    $region15: #{tpu_custom_call.1} parent=1 // pred_check_branch
      %52 = sbr.rel (0) target = $region17
    $region16: #{tpu_custom_call.1} parent=1 // pred_region
      %54 = vsyncadd [#allocation10], 0
      %s55 = sshll.u32 %s3, 4
      %s56 = int_to_ptr.hbm [resolvable:$true] %s55
      %s57 = sshll.u32 [#allocation9], 4
      %s58 = int_to_ptr.vmem [resolvable:$true] %s57
      %63 = dma.hbm_to_vmem [thread:$0]  %s56, 512, %s58, [#allocation10], 128, 128, 8
    $region17: #{tpu_custom_call.1} parent=1 // pred_fallthru
      _
    // Predicated region
    $region18: #{tpu_custom_call.1} parent=1 // pred_check
      _
    $region19: #{tpu_custom_call.1} parent=1 // pred_check_branch
      %65 = sbr.rel (0) target = $region21
    $region20: #{tpu_custom_call.1} parent=1 // pred_region
      _
    $region21: #{tpu_custom_call.1} parent=1 // pred_fallthru
      _
    // Predicated region
    $region22: #{tpu_custom_call.1} parent=1 // pred_check
      _
    $region23: #{tpu_custom_call.1} parent=1 // pred_check_branch
      %67 = sbr.rel (0) target = $region25
    $region24: #{tpu_custom_call.1} parent=1 // pred_region
      %69 = dma.done [#allocation4], 128
    $region25: #{tpu_custom_call.1} parent=1 // pred_fallthru
      _
    // Predicated region
    $region26: #{tpu_custom_call.1} parent=1 // pred_check
      _
    $region27: #{tpu_custom_call.1} parent=1 // pred_check_branch
      %71 = sbr.rel (0) target = $region29
    $region28: #{tpu_custom_call.1} parent=1 // pred_region
      %73 = dma.done [#allocation7], 2048
    $region29: #{tpu_custom_call.1} parent=1 // pred_fallthru
      _
    // Predicated region
    $region30: #{tpu_custom_call.1} parent=1 // pred_check
      _
    $region31: #{tpu_custom_call.1} parent=1 // pred_check_branch
      %75 = sbr.rel (0) target = $region33
    $region32: #{tpu_custom_call.1} parent=1 // pred_region
      %77 = dma.done [#allocation7], 512
    $region33: #{tpu_custom_call.1} parent=1 // pred_fallthru
      _
    // Predicated region
    $region34: #{tpu_custom_call.1} parent=1 // pred_check
      _
    $region35: #{tpu_custom_call.1} parent=1 // pred_check_branch
      %79 = sbr.rel (0) target = $region37
    $region36: #{tpu_custom_call.1} parent=1 // pred_region
      %81 = dma.done [#allocation10], 512
    $region37: #{tpu_custom_call.1} parent=1 // pred_fallthru
      _
    %p82 = scmp.eq.s32.totalorder 0, 0
    // Predicated region
    $region38: #{tpu_custom_call.1} parent=1 // pred_check
      %p83 = pneg %p82
    $region39: #{tpu_custom_call.1} parent=1 // pred_check_branch
      %85 = sbr.rel (%p83) target = $region41
    $region40: #{tpu_custom_call.1} parent=1 // pred_region
      %vm86 = vcmask 261120
      %87 = vst.msk [vmem:[#allocation2] sm:$0xff] %vm86, 0.0
    $region41: #{tpu_custom_call.1} parent=1 // pred_fallthru
      _
    %v88 = vld [vmem:[#allocation6] sm:$0xff]
    %v89 = vld [vmem:[#allocation6 + $0x8] sm:$0xff]
    %v90 = vld [vmem:[#allocation6 + $0x10] sm:$0xff]
    %v91 = vld [vmem:[#allocation6 + $0x18] sm:$0xff]
    %v92 = vld [vmem:[#allocation6 + $0x20] sm:$0xff]
    %v93 = vld [vmem:[#allocation6 + $0x28] sm:$0xff]
    %v94 = vld [vmem:[#allocation6 + $0x30] sm:$0xff]
    %v95 = vld [vmem:[#allocation6 + $0x38] sm:$0xff]
    %v96 = vld [vmem:[#allocation6 + $0x40] sm:$0xff]
    %v97 = vld [vmem:[#allocation6 + $0x48] sm:$0xff]
    %v98 = vld [vmem:[#allocation6 + $0x50] sm:$0xff]
    %v99 = vld [vmem:[#allocation6 + $0x58] sm:$0xff]
    %v100 = vld [vmem:[#allocation6 + $0x60] sm:$0xff]
    %v101 = vld [vmem:[#allocation6 + $0x68] sm:$0xff]
    %v102 = vld [vmem:[#allocation6 + $0x70] sm:$0xff]
    %v103 = vld [vmem:[#allocation6 + $0x78] sm:$0xff]
    %v104 = vld [vmem:[#allocation2] sm:$0xff]
    %vm105 = vcmask 261120
    %v106 = vsel %vm105, %v88, 0.0
    %v107 = vsel %vm105, %v89, 0.0
    %v108 = vadd.f32 %v106, %v107
    %v109 = vrot.slane %v108, 4
    %v110 = vadd.f32 %v108, %v109
    %v111 = vrot.slane %v110, 2
    %v112 = vadd.f32 %v110, %v111
    %v113 = vrot.slane %v112, 1
    %v114 = vadd.f32 %v112, %v113
    %v115 = vsel %vm105, %v90, 0.0
    %v116 = vsel %vm105, %v91, 0.0
    %v117 = vadd.f32 %v115, %v116
    %v118 = vrot.slane %v117, 4
    %v119 = vadd.f32 %v117, %v118
    %v120 = vrot.slane %v119, 2
    %v121 = vadd.f32 %v119, %v120
    %v122 = vrot.slane %v121, 1
    %v123 = vadd.f32 %v121, %v122
    %v124 = vsel %vm105, %v92, 0.0
    %v125 = vsel %vm105, %v93, 0.0
    %v126 = vadd.f32 %v124, %v125
    %v127 = vrot.slane %v126, 4
    %v128 = vadd.f32 %v126, %v127
    %v129 = vrot.slane %v128, 2
    %v130 = vadd.f32 %v128, %v129
    %v131 = vrot.slane %v130, 1
    %v132 = vadd.f32 %v130, %v131
    %v133 = vsel %vm105, %v94, 0.0
    %v134 = vsel %vm105, %v95, 0.0
    %v135 = vadd.f32 %v133, %v134
    %v136 = vrot.slane %v135, 4
    %v137 = vadd.f32 %v135, %v136
    %v138 = vrot.slane %v137, 2
    %v139 = vadd.f32 %v137, %v138
    %v140 = vrot.slane %v139, 1
    %v141 = vadd.f32 %v139, %v140
    %v142 = vsel %vm105, %v96, 0.0
    %v143 = vsel %vm105, %v97, 0.0
    %v144 = vadd.f32 %v142, %v143
    %v145 = vrot.slane %v144, 4
    %v146 = vadd.f32 %v144, %v145
    %v147 = vrot.slane %v146, 2
    %v148 = vadd.f32 %v146, %v147
    %v149 = vrot.slane %v148, 1
    %v150 = vadd.f32 %v148, %v149
    %v151 = vsel %vm105, %v98, 0.0
    %v152 = vsel %vm105, %v99, 0.0
    %v153 = vadd.f32 %v151, %v152
    %v154 = vrot.slane %v153, 4
    %v155 = vadd.f32 %v153, %v154
    %v156 = vrot.slane %v155, 2
    %v157 = vadd.f32 %v155, %v156
    %v158 = vrot.slane %v157, 1
    %v159 = vadd.f32 %v157, %v158
    %v160 = vsel %vm105, %v100, 0.0
    %v161 = vsel %vm105, %v101, 0.0
    %v162 = vadd.f32 %v160, %v161
    %v163 = vrot.slane %v162, 4
    %v164 = vadd.f32 %v162, %v163
    %v165 = vrot.slane %v164, 2
    %v166 = vadd.f32 %v164, %v165
    %v167 = vrot.slane %v166, 1
    %v168 = vadd.f32 %v166, %v167
    %v169 = vsel %vm105, %v102, 0.0
    %v170 = vsel %vm105, %v103, 0.0
    %v171 = vadd.f32 %v169, %v170
    %v172 = vrot.slane %v171, 4
    %v173 = vadd.f32 %v171, %v172
    %v174 = vrot.slane %v173, 2
    %v175 = vadd.f32 %v173, %v174
    %v176 = vrot.slane %v175, 1
    %v177 = vadd.f32 %v175, %v176
    %vm186 = vcmask 1041409
    %v187 = vsel %vm186, %v123, %v114
    %vm188 = vcmask 1042434
    %v189 = vsel %vm188, %v132, %v187
    %vm190 = vcmask 1043459
    %v191 = vsel %vm190, %v141, %v189
    %vm192 = vcmask 1044484
    %v193 = vsel %vm192, %v150, %v191
    %vm194 = vcmask 1045509
    %v195 = vsel %vm194, %v159, %v193
    %vm196 = vcmask 1046534
    %v197 = vsel %vm196, %v168, %v195
    %vm198 = vcmask 1047559
    %v199 = vsel %vm198, %v177, %v197
    %v201 = vadd.f32 %v104, %v199
    %202 = vst.msk [vmem:[#allocation2] sm:$0xff] %vm105, %v201
    // Predicated region
    $region42: #{tpu_custom_call.1} parent=1 // pred_check
      %p203 = pneg %p82
    $region43: #{tpu_custom_call.1} parent=1 // pred_check_branch
      %205 = sbr.rel (%p203) target = $region45
    $region44: #{tpu_custom_call.1} parent=1 // pred_region
      %v206 = vld [vmem:[#allocation3] sm:$0xff]
      %v207 = vld [vmem:[#allocation2] sm:$0xff]
      %v208 = vld [vmem:[#allocation8] sm:$0xff]
      %v209 = vld [vmem:[#allocation8 + $0x8] sm:$0xff]
      %v210 = vld [vmem:[#allocation8 + $0x10] sm:$0xff]
      %v211 = vld [vmem:[#allocation8 + $0x18] sm:$0xff]
      %v212 = vld [vmem:[#allocation9] sm:$0xff]
      %v213 = vld [vmem:[#allocation9 + $0x8] sm:$0xff]
      %v214 = vld [vmem:[#allocation9 + $0x10] sm:$0xff]
      %v215 = vld [vmem:[#allocation9 + $0x18] sm:$0xff]
      %v217 = vsel %vm105, %v207, 0
      %219 = vmatpush.msra.mxu0 0.0
      %220 = vmatpush.msra.mxu0 0.0
      %221 = vmatpush.msra.mxu0 0.0
      %222 = vmatpush.msra.mxu0 0.0
      %223 = vmatpush.msra.mxu0 0.0
      %224 = vmatpush.msra.mxu0 0.0
      %225 = vmatpush.msra.mxu0 0.0
      %226 = vmatpush.msra.mxu0 0.0
      %227 = vmatpush.msra.mxu0 0.0
      %228 = vmatpush.msra.mxu0 0.0
      %229 = vmatpush.msra.mxu0 0.0
      %230 = vmatpush.msra.mxu0 0.0
      %v231 = vand.u32 %v215, 4294901760
      %232 = vmatpush.msra.mxu0 %v231
      %v233 = vand.u32 %v214, 4294901760
      %234 = vmatpush.msra.mxu0 %v233
      %v235 = vand.u32 %v213, 4294901760
      %236 = vmatpush.msra.mxu0 %v235
      %v237 = vand.u32 %v212, 4294901760
      %238 = vmatpush.msra.mxu0 %v237
      %v239 = vand.u32 %v217, 4294901760
      %v240 = vsub.f32 %v217, %v239
      %v241 = vand.u32 %v240, 4294901760
      %v242 = vsub.f32 %v240, %v241
      %v243 = vand.u32 %v242, 4294901760
      %244 = vmatmul.f32.gmra.mxu0 %v243
      %v245 = vpop.f32.mrf.mxu0
      %v246 = vadd.f32 0.0, %v245
      %247 = vdwg.mxu0
      %248 = vmatpush.msra.mxu0 0.0
      %249 = vmatpush.msra.mxu0 0.0
      %250 = vmatpush.msra.mxu0 0.0
      %251 = vmatpush.msra.mxu0 0.0
      %252 = vmatpush.msra.mxu0 0.0
      %253 = vmatpush.msra.mxu0 0.0
      %254 = vmatpush.msra.mxu0 0.0
      %255 = vmatpush.msra.mxu0 0.0
      %256 = vmatpush.msra.mxu0 0.0
      %257 = vmatpush.msra.mxu0 0.0
      %258 = vmatpush.msra.mxu0 0.0
      %259 = vmatpush.msra.mxu0 0.0
      %v260 = vand.u32 %v215, 4294901760
      %v261 = vsub.f32 %v215, %v260
      %v262 = vand.u32 %v261, 4294901760
      %v263 = vsub.f32 %v261, %v262
      %v264 = vand.u32 %v263, 4294901760
      %265 = vmatpush.msra.mxu0 %v264
      %v266 = vand.u32 %v214, 4294901760
      %v267 = vsub.f32 %v214, %v266
      %v268 = vand.u32 %v267, 4294901760
      %v269 = vsub.f32 %v267, %v268
      %v270 = vand.u32 %v269, 4294901760
      %271 = vmatpush.msra.mxu0 %v270
      %v272 = vand.u32 %v213, 4294901760
      %v273 = vsub.f32 %v213, %v272
      %v274 = vand.u32 %v273, 4294901760
      %v275 = vsub.f32 %v273, %v274
      %v276 = vand.u32 %v275, 4294901760
      %277 = vmatpush.msra.mxu0 %v276
      %v278 = vand.u32 %v212, 4294901760
      %v279 = vsub.f32 %v212, %v278
      %v280 = vand.u32 %v279, 4294901760
      %v281 = vsub.f32 %v279, %v280
      %v282 = vand.u32 %v281, 4294901760
      %283 = vmatpush.msra.mxu0 %v282
      %v284 = vand.u32 %v217, 4294901760
      %285 = vmatmul.f32.gmra.mxu0 %v284
      %v286 = vpop.f32.mrf.mxu0
      %v287 = vadd.f32 %v246, %v286
      %288 = vdwg.mxu0
      %289 = vmatpush.msra.mxu0 0.0
      %290 = vmatpush.msra.mxu0 0.0
      %291 = vmatpush.msra.mxu0 0.0
      %292 = vmatpush.msra.mxu0 0.0
      %293 = vmatpush.msra.mxu0 0.0
      %294 = vmatpush.msra.mxu0 0.0
      %295 = vmatpush.msra.mxu0 0.0
      %296 = vmatpush.msra.mxu0 0.0
      %297 = vmatpush.msra.mxu0 0.0
      %298 = vmatpush.msra.mxu0 0.0
      %299 = vmatpush.msra.mxu0 0.0
      %300 = vmatpush.msra.mxu0 0.0
      %v301 = vand.u32 %v215, 4294901760
      %v302 = vsub.f32 %v215, %v301
      %303 = vmatpush.msra.mxu0 %v302
      %v304 = vand.u32 %v214, 4294901760
      %v305 = vsub.f32 %v214, %v304
      %306 = vmatpush.msra.mxu0 %v305
      %v307 = vand.u32 %v213, 4294901760
      %v308 = vsub.f32 %v213, %v307
      %309 = vmatpush.msra.mxu0 %v308
      %v310 = vand.u32 %v212, 4294901760
      %v311 = vsub.f32 %v212, %v310
      %312 = vmatpush.msra.mxu0 %v311
      %v313 = vand.u32 %v217, 4294901760
      %v314 = vsub.f32 %v217, %v313
      %315 = vmatmul.f32.gmra.mxu0 %v314
      %v316 = vpop.f32.mrf.mxu0
      %v317 = vadd.f32 %v287, %v316
      %318 = vdwg.mxu0
      %319 = vmatpush.msra.mxu0 0.0
      %320 = vmatpush.msra.mxu0 0.0
      %321 = vmatpush.msra.mxu0 0.0
      %322 = vmatpush.msra.mxu0 0.0
      %323 = vmatpush.msra.mxu0 0.0
      %324 = vmatpush.msra.mxu0 0.0
      %325 = vmatpush.msra.mxu0 0.0
      %326 = vmatpush.msra.mxu0 0.0
      %327 = vmatpush.msra.mxu0 0.0
      %328 = vmatpush.msra.mxu0 0.0
      %329 = vmatpush.msra.mxu0 0.0
      %330 = vmatpush.msra.mxu0 0.0
      %v331 = vand.u32 %v215, 4294901760
      %332 = vmatpush.msra.mxu0 %v331
      %v333 = vand.u32 %v214, 4294901760
      %334 = vmatpush.msra.mxu0 %v333
      %v335 = vand.u32 %v213, 4294901760
      %336 = vmatpush.msra.mxu0 %v335
      %v337 = vand.u32 %v212, 4294901760
      %338 = vmatpush.msra.mxu0 %v337
      %v339 = vand.u32 %v217, 4294901760
      %v340 = vsub.f32 %v217, %v339
      %v341 = vand.u32 %v340, 4294901760
      %342 = vmatmul.f32.gmra.mxu0 %v341
      %v343 = vpop.f32.mrf.mxu0
      %v344 = vadd.f32 %v317, %v343
      %345 = vdwg.mxu0
      %346 = vmatpush.msra.mxu0 0.0
      %347 = vmatpush.msra.mxu0 0.0
      %348 = vmatpush.msra.mxu0 0.0
      %349 = vmatpush.msra.mxu0 0.0
      %350 = vmatpush.msra.mxu0 0.0
      %351 = vmatpush.msra.mxu0 0.0
      %352 = vmatpush.msra.mxu0 0.0
      %353 = vmatpush.msra.mxu0 0.0
      %354 = vmatpush.msra.mxu0 0.0
      %355 = vmatpush.msra.mxu0 0.0
      %356 = vmatpush.msra.mxu0 0.0
      %357 = vmatpush.msra.mxu0 0.0
      %v358 = vand.u32 %v215, 4294901760
      %v359 = vsub.f32 %v215, %v358
      %v360 = vand.u32 %v359, 4294901760
      %361 = vmatpush.msra.mxu0 %v360
      %v362 = vand.u32 %v214, 4294901760
      %v363 = vsub.f32 %v214, %v362
      %v364 = vand.u32 %v363, 4294901760
      %365 = vmatpush.msra.mxu0 %v364
      %v366 = vand.u32 %v213, 4294901760
      %v367 = vsub.f32 %v213, %v366
      %v368 = vand.u32 %v367, 4294901760
      %369 = vmatpush.msra.mxu0 %v368
      %v370 = vand.u32 %v212, 4294901760
      %v371 = vsub.f32 %v212, %v370
      %v372 = vand.u32 %v371, 4294901760
      %373 = vmatpush.msra.mxu0 %v372
      %v374 = vand.u32 %v217, 4294901760
      %375 = vmatmul.f32.gmra.mxu0 %v374
      %v376 = vpop.f32.mrf.mxu0
      %v377 = vadd.f32 %v344, %v376
      %378 = vdwg.mxu0
      %379 = vmatpush.msra.mxu0 0.0
      %380 = vmatpush.msra.mxu0 0.0
      %381 = vmatpush.msra.mxu0 0.0
      %382 = vmatpush.msra.mxu0 0.0
      %383 = vmatpush.msra.mxu0 0.0
      %384 = vmatpush.msra.mxu0 0.0
      %385 = vmatpush.msra.mxu0 0.0
      %386 = vmatpush.msra.mxu0 0.0
      %387 = vmatpush.msra.mxu0 0.0
      %388 = vmatpush.msra.mxu0 0.0
      %389 = vmatpush.msra.mxu0 0.0
      %390 = vmatpush.msra.mxu0 0.0
      %v391 = vand.u32 %v215, 4294901760
      %392 = vmatpush.msra.mxu0 %v391
      %v393 = vand.u32 %v214, 4294901760
      %394 = vmatpush.msra.mxu0 %v393
      %v395 = vand.u32 %v213, 4294901760
      %396 = vmatpush.msra.mxu0 %v395
      %v397 = vand.u32 %v212, 4294901760
      %398 = vmatpush.msra.mxu0 %v397
      %v399 = vand.u32 %v217, 4294901760
      %400 = vmatmul.f32.gmra.mxu0 %v399
      %v401 = vpop.f32.mrf.mxu0
      %v402 = vadd.f32 %v377, %v401
      %403 = vdwg.mxu0
      %v405 = vsel %vm105, %v206, 0
      %407 = vmatpush.msra.mxu0 0.0
      %408 = vmatpush.msra.mxu0 0.0
      %409 = vmatpush.msra.mxu0 0.0
      %410 = vmatpush.msra.mxu0 0.0
      %411 = vmatpush.msra.mxu0 0.0
      %412 = vmatpush.msra.mxu0 0.0
      %413 = vmatpush.msra.mxu0 0.0
      %414 = vmatpush.msra.mxu0 0.0
      %415 = vmatpush.msra.mxu0 0.0
      %416 = vmatpush.msra.mxu0 0.0
      %417 = vmatpush.msra.mxu0 0.0
      %418 = vmatpush.msra.mxu0 0.0
      %v419 = vand.u32 %v211, 4294901760
      %420 = vmatpush.msra.mxu0 %v419
      %v421 = vand.u32 %v210, 4294901760
      %422 = vmatpush.msra.mxu0 %v421
      %v423 = vand.u32 %v209, 4294901760
      %424 = vmatpush.msra.mxu0 %v423
      %v425 = vand.u32 %v208, 4294901760
      %426 = vmatpush.msra.mxu0 %v425
      %v427 = vand.u32 %v405, 4294901760
      %v428 = vsub.f32 %v405, %v427
      %v429 = vand.u32 %v428, 4294901760
      %v430 = vsub.f32 %v428, %v429
      %v431 = vand.u32 %v430, 4294901760
      %432 = vmatmul.f32.gmra.mxu0 %v431
      %v433 = vpop.f32.mrf.mxu0
      %v434 = vadd.f32 %v402, %v433
      %435 = vdwg.mxu0
      %436 = vmatpush.msra.mxu0 0.0
      %437 = vmatpush.msra.mxu0 0.0
      %438 = vmatpush.msra.mxu0 0.0
      %439 = vmatpush.msra.mxu0 0.0
      %440 = vmatpush.msra.mxu0 0.0
      %441 = vmatpush.msra.mxu0 0.0
      %442 = vmatpush.msra.mxu0 0.0
      %443 = vmatpush.msra.mxu0 0.0
      %444 = vmatpush.msra.mxu0 0.0
      %445 = vmatpush.msra.mxu0 0.0
      %446 = vmatpush.msra.mxu0 0.0
      %447 = vmatpush.msra.mxu0 0.0
      %v448 = vand.u32 %v211, 4294901760
      %v449 = vsub.f32 %v211, %v448
      %v450 = vand.u32 %v449, 4294901760
      %v451 = vsub.f32 %v449, %v450
      %v452 = vand.u32 %v451, 4294901760
      %453 = vmatpush.msra.mxu0 %v452
      %v454 = vand.u32 %v210, 4294901760
      %v455 = vsub.f32 %v210, %v454
      %v456 = vand.u32 %v455, 4294901760
      %v457 = vsub.f32 %v455, %v456
      %v458 = vand.u32 %v457, 4294901760
      %459 = vmatpush.msra.mxu0 %v458
      %v460 = vand.u32 %v209, 4294901760
      %v461 = vsub.f32 %v209, %v460
      %v462 = vand.u32 %v461, 4294901760
      %v463 = vsub.f32 %v461, %v462
      %v464 = vand.u32 %v463, 4294901760
      %465 = vmatpush.msra.mxu0 %v464
      %v466 = vand.u32 %v208, 4294901760
      %v467 = vsub.f32 %v208, %v466
      %v468 = vand.u32 %v467, 4294901760
      %v469 = vsub.f32 %v467, %v468
      %v470 = vand.u32 %v469, 4294901760
      %471 = vmatpush.msra.mxu0 %v470
      %v472 = vand.u32 %v405, 4294901760
      %473 = vmatmul.f32.gmra.mxu0 %v472
      %v474 = vpop.f32.mrf.mxu0
      %v475 = vadd.f32 %v434, %v474
      %476 = vdwg.mxu0
      %477 = vmatpush.msra.mxu0 0.0
      %478 = vmatpush.msra.mxu0 0.0
      %479 = vmatpush.msra.mxu0 0.0
      %480 = vmatpush.msra.mxu0 0.0
      %481 = vmatpush.msra.mxu0 0.0
      %482 = vmatpush.msra.mxu0 0.0
      %483 = vmatpush.msra.mxu0 0.0
      %484 = vmatpush.msra.mxu0 0.0
      %485 = vmatpush.msra.mxu0 0.0
      %486 = vmatpush.msra.mxu0 0.0
      %487 = vmatpush.msra.mxu0 0.0
      %488 = vmatpush.msra.mxu0 0.0
      %v489 = vand.u32 %v211, 4294901760
      %v490 = vsub.f32 %v211, %v489
      %491 = vmatpush.msra.mxu0 %v490
      %v492 = vand.u32 %v210, 4294901760
      %v493 = vsub.f32 %v210, %v492
      %494 = vmatpush.msra.mxu0 %v493
      %v495 = vand.u32 %v209, 4294901760
      %v496 = vsub.f32 %v209, %v495
      %497 = vmatpush.msra.mxu0 %v496
      %v498 = vand.u32 %v208, 4294901760
      %v499 = vsub.f32 %v208, %v498
      %500 = vmatpush.msra.mxu0 %v499
      %v501 = vand.u32 %v405, 4294901760
      %v502 = vsub.f32 %v405, %v501
      %503 = vmatmul.f32.gmra.mxu0 %v502
      %v504 = vpop.f32.mrf.mxu0
      %v505 = vadd.f32 %v475, %v504
      %506 = vdwg.mxu0
      %507 = vmatpush.msra.mxu0 0.0
      %508 = vmatpush.msra.mxu0 0.0
      %509 = vmatpush.msra.mxu0 0.0
      %510 = vmatpush.msra.mxu0 0.0
      %511 = vmatpush.msra.mxu0 0.0
      %512 = vmatpush.msra.mxu0 0.0
      %513 = vmatpush.msra.mxu0 0.0
      %514 = vmatpush.msra.mxu0 0.0
      %515 = vmatpush.msra.mxu0 0.0
      %516 = vmatpush.msra.mxu0 0.0
      %517 = vmatpush.msra.mxu0 0.0
      %518 = vmatpush.msra.mxu0 0.0
      %v519 = vand.u32 %v211, 4294901760
      %520 = vmatpush.msra.mxu0 %v519
      %v521 = vand.u32 %v210, 4294901760
      %522 = vmatpush.msra.mxu0 %v521
      %v523 = vand.u32 %v209, 4294901760
      %524 = vmatpush.msra.mxu0 %v523
      %v525 = vand.u32 %v208, 4294901760
      %526 = vmatpush.msra.mxu0 %v525
      %v527 = vand.u32 %v405, 4294901760
      %v528 = vsub.f32 %v405, %v527
      %v529 = vand.u32 %v528, 4294901760
      %530 = vmatmul.f32.gmra.mxu0 %v529
      %v531 = vpop.f32.mrf.mxu0
      %v532 = vadd.f32 %v505, %v531
      %533 = vdwg.mxu0
      %534 = vmatpush.msra.mxu0 0.0
      %535 = vmatpush.msra.mxu0 0.0
      %536 = vmatpush.msra.mxu0 0.0
      %537 = vmatpush.msra.mxu0 0.0
      %538 = vmatpush.msra.mxu0 0.0
      %539 = vmatpush.msra.mxu0 0.0
      %540 = vmatpush.msra.mxu0 0.0
      %541 = vmatpush.msra.mxu0 0.0
      %542 = vmatpush.msra.mxu0 0.0
      %543 = vmatpush.msra.mxu0 0.0
      %544 = vmatpush.msra.mxu0 0.0
      %545 = vmatpush.msra.mxu0 0.0
      %v546 = vand.u32 %v211, 4294901760
      %v547 = vsub.f32 %v211, %v546
      %v548 = vand.u32 %v547, 4294901760
      %549 = vmatpush.msra.mxu0 %v548
      %v550 = vand.u32 %v210, 4294901760
      %v551 = vsub.f32 %v210, %v550
      %v552 = vand.u32 %v551, 4294901760
      %553 = vmatpush.msra.mxu0 %v552
      %v554 = vand.u32 %v209, 4294901760
      %v555 = vsub.f32 %v209, %v554
      %v556 = vand.u32 %v555, 4294901760
      %557 = vmatpush.msra.mxu0 %v556
      %v558 = vand.u32 %v208, 4294901760
      %v559 = vsub.f32 %v208, %v558
      %v560 = vand.u32 %v559, 4294901760
      %561 = vmatpush.msra.mxu0 %v560
      %v562 = vand.u32 %v405, 4294901760
      %563 = vmatmul.f32.gmra.mxu0 %v562
      %v564 = vpop.f32.mrf.mxu0
      %v565 = vadd.f32 %v532, %v564
      %566 = vdwg.mxu0
      %567 = vmatpush.msra.mxu0 0.0
      %568 = vmatpush.msra.mxu0 0.0
      %569 = vmatpush.msra.mxu0 0.0
      %570 = vmatpush.msra.mxu0 0.0
      %571 = vmatpush.msra.mxu0 0.0
      %572 = vmatpush.msra.mxu0 0.0
      %573 = vmatpush.msra.mxu0 0.0
      %574 = vmatpush.msra.mxu0 0.0
      %575 = vmatpush.msra.mxu0 0.0
      %576 = vmatpush.msra.mxu0 0.0
      %577 = vmatpush.msra.mxu0 0.0
      %578 = vmatpush.msra.mxu0 0.0
      %v579 = vand.u32 %v211, 4294901760
      %580 = vmatpush.msra.mxu0 %v579
      %v581 = vand.u32 %v210, 4294901760
      %582 = vmatpush.msra.mxu0 %v581
      %v583 = vand.u32 %v209, 4294901760
      %584 = vmatpush.msra.mxu0 %v583
      %v585 = vand.u32 %v208, 4294901760
      %586 = vmatpush.msra.mxu0 %v585
      %v587 = vand.u32 %v405, 4294901760
      %588 = vmatmul.f32.gmra.mxu0 %v587
      %v589 = vpop.f32.mrf.mxu0
      %v590 = vadd.f32 %v565, %v589
      %591 = vdwg.mxu0
      %v592 = vld [vmem:[%s4] sm:$0x1]
      %v594 = vperm.slane %v592, 0
      %v596 = vadd.f32 %v590, %v594
      %597 = vst [vmem:[#allocation11] sm:$0xff] %v596
    $region45: #{tpu_custom_call.1} parent=1 // pred_fallthru
      _
    // Predicated region
    $region46: #{tpu_custom_call.1} parent=1 // pred_check
      _
    $region47: #{tpu_custom_call.1} parent=1 // pred_check_branch
      %599 = sbr.rel (0) target = $region49
    $region48: #{tpu_custom_call.1} parent=1 // pred_region
      %601 = vsyncadd [#allocation5], 0
      %s603 = sshll.u32 [#allocation11], 4
      %s604 = int_to_ptr.vmem [resolvable:$true] %s603
      %s605 = sshll.u32 %s5, 4
      %s606 = int_to_ptr.hbm [resolvable:$true] %s605
      %608 = dma.vmem_to_hbm [thread:$0]  %s604, 128, %s606, [#allocation5]
    $region49: #{tpu_custom_call.1} parent=1 // pred_fallthru
      _
    // Predicated region
    $region50: #{tpu_custom_call.1} parent=1 // pred_check
      _
    $region51: #{tpu_custom_call.1} parent=1 // pred_check_branch
      %610 = sbr.rel (0) target = $region53
    $region52: #{tpu_custom_call.1} parent=1 // pred_region
      %612 = dma.done [#allocation5], 128
    $region53: #{tpu_custom_call.1} parent=1 // pred_fallthru
      _
    %613 = vsyncpa [#allocation4], 1
    %614 = vsyncpa [#allocation7], 1
    %615 = vsyncpa [#allocation10], 1
    %616 = vsyncpa [#allocation5], 1

</llo_original>
